<compile_context>
chip_gen: v7x
topology: tpu7x:2x2x1
jax: 0.10.0
libtpu: 0.0.40
codegen_flags: <defaults>
</compile_context>

<pallas_src>
import functools

import jax
import jax.numpy as jnp
from jax.experimental import pallas as pl
from jax.experimental.pallas import tpu as pltpu

_INV_SQRT2 = 0.7071067811865476


def _gelu_exact(x):
    # torch.nn.functional.gelu default (erf form), f32 VPU/EUP math.
    return 0.5 * x * (1.0 + jax.lax.erf(x * _INV_SQRT2))


# ----------------------------------------------------------------------------
# Kernel: the whole encoder for one batch tile.  All metadata is static Python.
# ----------------------------------------------------------------------------
def _encoder_kernel(x_ref, w_ref, b_ref, out_ref, *, blocks, seg_len):
    """x_ref: (Cin0, N) f32 with N = B_TILE*L (batch folded into lanes).
    w_ref: (rows, max_cols) bf16 packed im2col weights (all convs, all blocks).
    b_ref: (rows, 1) f32 packed biases.  out_ref: (C_last, N) f32."""
    L = seg_len
    N = x_ref.shape[1]
    # Position of each lane inside its length-L batch segment.
    pos = jax.lax.broadcasted_iota(jnp.int32, (1, N), 1) % L
    mask_cache = {}

    def seg_mask(off):
        # Valid lanes: x[t + off] lies inside the same length-L segment.
        if off not in mask_cache:
            mask_cache[off] = jnp.logical_and(pos + off >= 0, pos + off < L)
        return mask_cache[off]

    def shifted(x, off):
        # x[:, t + off] within each segment, 0 outside ('same' zero padding).
        # pltpu.roll keeps the shifting on the XLU; the mask kills both the
        # segment-boundary bleed and the cyclic wrap of the roll.
        t = x if off == 0 else pltpu.roll(x, (-off) % N, axis=1)
        return jnp.where(seg_mask(off), t, 0.0)

    def conv(x, meta):
        # Dilated stride-1 'same' Conv1d == one im2col MXU matmul
        # (Cout, K*Cin) @ (K*Cin, N), bf16 operands, f32 accumulation.
        row, cout, cin, K, dil = meta
        w = w_ref[row:row + cout, 0:K * cin]            # bf16, static slice
        b = b_ref[row:row + cout, :]                    # f32 (cout, 1)
        if K == 1:
            rhs = x.astype(jnp.bfloat16)
        else:
            pad = (dil * (K - 1)) // 2                  # odd receptive field
            rhs = jnp.concatenate(
                [shifted(x, k * dil - pad) for k in range(K)], axis=0
            ).astype(jnp.bfloat16)                      # (K*cin, N), VMEM only
        return jnp.dot(w, rhs, preferred_element_type=jnp.float32) + b

    x = x_ref[...]                                      # (Cin0, N) f32
    res_prev = None
    for bm in blocks:
        # --- dilated-conv branches: conv1 -> conv2 -> GELU --------------------
        branch = []
        for c1, c2 in bm["units"]:
            branch.append(_gelu_exact(conv(conv(x, c1), c2)))
        bcat = jnp.concatenate(branch, axis=0)          # (nk*hidden, N)
        if res_prev is not None:
            # residual_fin for ALL branches in one block-diagonal matmul.
            bcat = bcat + conv(res_prev, bm["rf"])
        # --- maxpool branch: MaxPool1d(3,1,1) -> GELU -> 1x1 conv -------------
        # Edge replication == the implicit -inf padding (centre always in window);
        # rolls + the segment mask keep batch elements independent.
        left = jnp.where(pos >= 1, pltpu.roll(x, 1, axis=1), x)          # x[t-1]
        right = jnp.where(pos <= L - 2, pltpu.roll(x, N - 1, axis=1), x)  # x[t+1]
        gm = _gelu_exact(jnp.maximum(jnp.maximum(x, left), right))
        cat = jnp.concatenate([bcat, conv(gm, bm["mp"])], axis=0)
        # --- aggregator Conv1d(hidden*(nk+1), out_ch, 3, padding=1) -----------
        y = conv(cat, bm["agg"])
        # --- skip connection ---------------------------------------------------
        y = y + (conv(x, bm["res"]) if bm["res"] is not None else x)
        x, res_prev = y, bcat
    out_ref[...] = x.astype(out_ref.dtype)


# ----------------------------------------------------------------------------
# Wrapper: one fused pallas_call for the entire encoder.
# ----------------------------------------------------------------------------
def inception_dilated_conv_encoder(params, x, b_tile=None):
    B, cin, L = x.shape
    assert cin == params["in_channels"]
    assert L % 128 == 0, "L must be lane-aligned (multiple of 128)"
    assert params["max_off"] < L, "dilation halo must fit inside one segment"
    c_last = params["out_channels"]

    if b_tile is None:
        # Fold 2 batch elements into N=2*L (fills the 256-wide v6e/v7x MXU).
        # For large B on v7x, keep B//b_tile >= 2 so both TensorCores get work.
        b_tile = 2 if B % 2 == 0 else 1
    assert B % b_tile == 0
    n = b_tile * L

    # Layout plumbing only: present x as a lane-dense (Cin, B*L) slab.
    xt = jnp.transpose(x, (1, 0, 2)).reshape(cin, B * L)
    w_pack, b_pack = params["w_pack"], params["b_pack"]

    kernel = functools.partial(_encoder_kernel, blocks=params["blocks"], seg_len=L)

    out = pl.pallas_call(
        kernel,
        grid=(B // b_tile,),
        in_specs=[
            pl.BlockSpec((cin, n), lambda b: (0, b)),
            pl.BlockSpec(w_pack.shape, lambda b: (0, 0)),   # packed weights
            pl.BlockSpec(b_pack.shape, lambda b: (0, 0)),   # packed biases
        ],
        out_specs=pl.BlockSpec((c_last, n), lambda b: (0, b)),
        out_shape=jax.ShapeDtypeStruct((c_last, B * L), jnp.float32),
        compiler_params=pltpu.CompilerParams(
            dimension_semantics=("parallel",),
            vmem_limit_bytes=32 * 1024 * 1024,              # explicit for v7x (64 MiB phys)
        ),
    )(xt, w_pack, b_pack)
    return out.reshape(c_last, B, L).transpose(1, 0, 2)


# ----------------------------------------------------------------------------
# Parameter init + packing: PyTorch Conv1d default uniform init, im2col-
# flattened bf16 weights packed into ONE array, biases into ONE (rows, 1) f32.
# ----------------------------------------------------------------------------
def _torch_conv1d_params(key, cout, cin, k):
    kw, kb = jax.random.split(key)
    bound = 1.0 / float(cin * k) ** 0.5
    w = jax.random.uniform(kw, (cout, cin, k), jnp.float32, -bound, bound)
    b = jax.random.uniform(kb, (cout,), jnp.float32, -bound, bound)
    return w, b


class _ParamPacker:
    def __init__(self):
        self.rows = 0
        self.max_cols = 0
        self.items = []  # (row, w_flat f32 (cout, K*cin), bias (cout,))

    def add(self, w, b, dil):
        cout, cin, k = w.shape
        assert cout % 8 == 0 and cin % 8 == 0, "channels must be 8-aligned (sublane)"
        # im2col layout: w_flat[co, kk*cin + ci] == w[co, ci, kk]
        w_flat = jnp.transpose(w, (0, 2, 1)).reshape(cout, k * cin)
        row = self.rows
        self.rows += cout
        self.max_cols = max(self.max_cols, k * cin)
        self.items.append((row, w_flat, b))
        return (row, cout, cin, k, dil)                 # static metadata tuple

    def build(self):
        w_pack = jnp.zeros((self.rows, self.max_cols), jnp.float32)
        b_pack = jnp.zeros((self.rows, 1), jnp.float32)
        for row, w_flat, b in self.items:
            cout, cols = w_flat.shape
            w_pack = w_pack.at[row:row + cout, 0:cols].set(w_flat)
            b_pack = b_pack.at[row:row + cout, 0].set(b)
        return w_pack.astype(jnp.bfloat16), b_pack


def init_encoder_params(key, in_channels, channels, kernel_sizes):
    nk = len(kernel_sizes)
    pk = _ParamPacker()
    blocks = []
    max_off = 0
    prev_hidden = None
    for i, out_ch in enumerate(channels):
        in_ch = channels[i - 1] if i > 0 else in_channels
        hidden = (channels[i - 1] // 4) if i > 0 else in_channels // 4
        index = i + 1
        bm = {"units": []}
        for ks in kernel_sizes:
            dil = (2 * ks - 1) ** (index - 1)            # BasicUnit.last_reception
            # SamePadConv.remove > 0 (even receptive field) unsupported here.
            assert ((ks - 1) * dil) % 2 == 0, "even receptive field needs 'remove'"
            max_off = max(max_off, (dil * (ks - 1)) // 2)
            key, k1, k2 = jax.random.split(key, 3)
            c1 = pk.add(*_torch_conv1d_params(k1, hidden, in_ch, ks), dil)   # conv1
            c2 = pk.add(*_torch_conv1d_params(k2, hidden, hidden, ks), dil)  # conv2
            bm["units"].append((c1, c2))
        key, kmp, krf, kag, kres = jax.random.split(key, 5)
        bm["mp"] = pk.add(*_torch_conv1d_params(kmp, hidden, in_ch, 1), 1)   # maxpool 1x1
        if i > 0:
            # residual_fin (one shared 1x1 conv) -> block-diagonal weight over
            # the concatenated res_prev so all nk branch adds are one matmul.
            assert prev_hidden == hidden, "residual_fin needs matching hidden widths"
            wrf, brf = _torch_conv1d_params(krf, hidden, hidden, 1)
            wbd = jnp.kron(jnp.eye(nk, dtype=jnp.float32), wrf[:, :, 0])
            bm["rf"] = pk.add(wbd.reshape(nk * hidden, nk * hidden, 1),
                              jnp.tile(brf, nk), 1)
        else:
            bm["rf"] = None
        bm["agg"] = pk.add(*_torch_conv1d_params(kag, out_ch, hidden * (nk + 1), 3), 1)
        bm["res"] = (pk.add(*_torch_conv1d_params(kres, out_ch, in_ch, 1), 1)
                     if in_ch != out_ch else None)        # use_residual skip conv
        blocks.append(bm)
        prev_hidden = hidden
    w_pack, b_pack = pk.build()
    return {"blocks": tuple(blocks), "w_pack": w_pack, "b_pack": b_pack,
            "in_channels": in_channels, "out_channels": channels[-1],
            "max_off": max_off}


if __name__ == "__main__":
    key = jax.random.PRNGKey(0)
    # hidden = in_channels // 4; the cross-layer residual_fin needs matching
    # hidden widths, so channels[0] == in_channels.  Channels are multiples of 8
    # (sublane aligned); L = 128 keeps matmul operands / stores lane-dense.
    in_channels = 32
    channels = [32, 64]
    kernel_sizes = [3, 5]
    B, L = 2, 128

    kp, kx = jax.random.split(key)
    params = init_encoder_params(kp, in_channels, channels, kernel_sizes)
    x = jax.random.normal(kx, (B, in_channels, L), jnp.float32)

    out = inception_dilated_conv_encoder(params, x)
    out = jax.block_until_ready(out)

    assert out.shape == (B, channels[-1], L), out.shape
    assert bool(jnp.all(jnp.isfinite(out)))
    print("KERNEL_OK")
</pallas_src>

<mosaic_0001>
module attributes {stable_mosaic.version = 11 : i64} {
  func.func @_encoder_kernel(%arg0: i32, %arg1: memref<32x256xf32, #tpu.memory_space<vmem>>, %arg2: memref<256x160xbf16, #tpu.memory_space<vmem>>, %arg3: memref<256x1xf32, #tpu.memory_space<vmem>>, %arg4: memref<64x256xf32, #tpu.memory_space<vmem>>) attributes {dimension_semantics = [#tpu.dimension_semantics<parallel>], iteration_bounds = array<i64: 1>, scalar_prefetch = 0 : i64, scratch_operands = 0 : i64, tpu.core_type = #tpu.core_type<tc>, window_params = [{transform_indices = @transform_0, window_bounds = array<i64: 32, 256>}, {pipeline_mode = #tpu.pipeline_mode<synchronous>, transform_indices = @transform_1, window_bounds = array<i64: 256, 160>}, {pipeline_mode = #tpu.pipeline_mode<synchronous>, transform_indices = @transform_2, window_bounds = array<i64: 256, 1>}, {transform_indices = @transform_3, window_bounds = array<i64: 64, 256>}]} {
    %0 = tpu.iota {dimensions = array<i32: 1>} : vector<1x256xi32>
    %c128_i32 = arith.constant 128 : i32
    %c0_i32 = arith.constant 0 : i32
    %1 = arith.cmpi eq, %c128_i32, %c0_i32 : i32
    %c1_i32 = arith.constant 1 : i32
    %2 = arith.select %1, %c1_i32, %c128_i32 : i32
    %3 = vector.broadcast %2 : i32 to vector<1x256xi32>
    %4 = arith.remsi %0, %3 : vector<1x256xi32>
    %c0_i32_0 = arith.constant 0 : i32
    %5 = vector.broadcast %c0_i32_0 : i32 to vector<1x256xi32>
    %6 = arith.cmpi ne, %4, %5 : vector<1x256xi32>
    %c0_i32_1 = arith.constant 0 : i32
    %7 = vector.broadcast %c0_i32_1 : i32 to vector<1x256xi32>
    %8 = arith.cmpi slt, %4, %7 : vector<1x256xi32>
    %c0_i32_2 = arith.constant 0 : i32
    %9 = arith.cmpi slt, %2, %c0_i32_2 : i32
    %10 = vector.broadcast %9 : i1 to vector<1x256xi1>
    %11 = vector.broadcast %10 : vector<1x256xi1> to vector<1x256xi1>
    %12 = arith.xori %8, %11 : vector<1x256xi1>
    %13 = arith.andi %12, %6 : vector<1x256xi1>
    %14 = vector.broadcast %2 : i32 to vector<1x256xi32>
    %15 = arith.addi %4, %14 : vector<1x256xi32>
    %16 = arith.select %13, %15, %4 : vector<1x256xi1>, vector<1x256xi32>
    %c0 = arith.constant 0 : index
    %c0_3 = arith.constant 0 : index
    %17 = vector.load %arg1[%c0, %c0_3] : memref<32x256xf32, #tpu.memory_space<vmem>>, vector<32x256xf32>
    %c0_4 = arith.constant 0 : index
    %c0_5 = arith.constant 0 : index
    %18 = vector.load %arg2[%c0_4, %c0_5] : memref<256x160xbf16, #tpu.memory_space<vmem>>, vector<8x96xbf16>
    %c0_6 = arith.constant 0 : index
    %c0_7 = arith.constant 0 : index
    %19 = vector.load %arg3[%c0_6, %c0_7] : memref<256x1xf32, #tpu.memory_space<vmem>>, vector<8x1xf32>
    %c1_i32_8 = arith.constant 1 : i32
    %20 = tpu.dynamic_rotate %17 by %c1_i32_8 dim 1 : vector<32x256xf32>, i32 -> vector<32x256xf32>
    %c-1_i32 = arith.constant -1 : i32
    %21 = vector.broadcast %c-1_i32 : i32 to vector<1x256xi32>
    %22 = arith.addi %16, %21 : vector<1x256xi32>
    %c0_i32_9 = arith.constant 0 : i32
    %23 = vector.broadcast %c0_i32_9 : i32 to vector<1x256xi32>
    %24 = arith.cmpi sge, %22, %23 : vector<1x256xi32>
    %c-1_i32_10 = arith.constant -1 : i32
    %25 = vector.broadcast %c-1_i32_10 : i32 to vector<1x256xi32>
    %26 = arith.addi %16, %25 : vector<1x256xi32>
    %c128_i32_11 = arith.constant 128 : i32
    %27 = vector.broadcast %c128_i32_11 : i32 to vector<1x256xi32>
    %28 = arith.cmpi slt, %26, %27 : vector<1x256xi32>
    %29 = arith.andi %24, %28 : vector<1x256xi1>
    %cst = arith.constant 0.000000e+00 : f32
    %30 = vector.shape_cast %29 : vector<1x256xi1> to vector<1x256xi1>
    %31 = vector.broadcast %30 : vector<1x256xi1> to vector<32x256xi1>
    %32 = vector.broadcast %cst : f32 to vector<32x256xf32>
    %33 = arith.select %31, %20, %32 : vector<32x256xi1>, vector<32x256xf32>
    %c0_i32_12 = arith.constant 0 : i32
    %34 = vector.broadcast %c0_i32_12 : i32 to vector<1x256xi32>
    %35 = arith.addi %16, %34 : vector<1x256xi32>
    %c0_i32_13 = arith.constant 0 : i32
    %36 = vector.broadcast %c0_i32_13 : i32 to vector<1x256xi32>
    %37 = arith.cmpi sge, %35, %36 : vector<1x256xi32>
    %c0_i32_14 = arith.constant 0 : i32
    %38 = vector.broadcast %c0_i32_14 : i32 to vector<1x256xi32>
    %39 = arith.addi %16, %38 : vector<1x256xi32>
    %c128_i32_15 = arith.constant 128 : i32
    %40 = vector.broadcast %c128_i32_15 : i32 to vector<1x256xi32>
    %41 = arith.cmpi slt, %39, %40 : vector<1x256xi32>
    %42 = arith.andi %37, %41 : vector<1x256xi1>
    %cst_16 = arith.constant 0.000000e+00 : f32
    %43 = vector.shape_cast %42 : vector<1x256xi1> to vector<1x256xi1>
    %44 = vector.broadcast %43 : vector<1x256xi1> to vector<32x256xi1>
    %45 = vector.broadcast %cst_16 : f32 to vector<32x256xf32>
    %46 = arith.select %44, %17, %45 : vector<32x256xi1>, vector<32x256xf32>
    %c255_i32 = arith.constant 255 : i32
    %47 = tpu.dynamic_rotate %17 by %c255_i32 dim 1 : vector<32x256xf32>, i32 -> vector<32x256xf32>
    %c1_i32_17 = arith.constant 1 : i32
    %48 = vector.broadcast %c1_i32_17 : i32 to vector<1x256xi32>
    %49 = arith.addi %16, %48 : vector<1x256xi32>
    %c0_i32_18 = arith.constant 0 : i32
    %50 = vector.broadcast %c0_i32_18 : i32 to vector<1x256xi32>
    %51 = arith.cmpi sge, %49, %50 : vector<1x256xi32>
    %c1_i32_19 = arith.constant 1 : i32
    %52 = vector.broadcast %c1_i32_19 : i32 to vector<1x256xi32>
    %53 = arith.addi %16, %52 : vector<1x256xi32>
    %c128_i32_20 = arith.constant 128 : i32
    %54 = vector.broadcast %c128_i32_20 : i32 to vector<1x256xi32>
    %55 = arith.cmpi slt, %53, %54 : vector<1x256xi32>
    %56 = arith.andi %51, %55 : vector<1x256xi1>
    %cst_21 = arith.constant 0.000000e+00 : f32
    %57 = vector.shape_cast %56 : vector<1x256xi1> to vector<1x256xi1>
    %58 = vector.broadcast %57 : vector<1x256xi1> to vector<32x256xi1>
    %59 = vector.broadcast %cst_21 : f32 to vector<32x256xf32>
    %60 = arith.select %58, %47, %59 : vector<32x256xi1>, vector<32x256xf32>
    %61 = tpu.concatenate %33, %46, %60 in 0 : vector<32x256xf32>, vector<32x256xf32>, vector<32x256xf32> -> vector<96x256xf32>
    %62 = arith.truncf %61 : vector<96x256xf32> to vector<96x256xbf16>
    %cst_22 = arith.constant dense<0.000000e+00> : vector<8x256xf32>
    %63 = tpu.matmul %18, %62, %cst_22 {dimension_numbers = #tpu.dot_dimension_numbers<[1], [0], [0], [1], [0, 0, 1, 1], [], []>} : vector<8x96xbf16>, vector<96x256xbf16>, vector<8x256xf32> -> vector<8x256xf32>
    %64 = vector.broadcast %19 : vector<8x1xf32> to vector<8x256xf32>
    %65 = arith.addf %63, %64 : vector<8x256xf32>
    %c8 = arith.constant 8 : index
    %c0_23 = arith.constant 0 : index
    %66 = vector.load %arg2[%c8, %c0_23] : memref<256x160xbf16, #tpu.memory_space<vmem>>, vector<8x24xbf16>
    %c8_24 = arith.constant 8 : index
    %c0_25 = arith.constant 0 : index
    %67 = vector.load %arg3[%c8_24, %c0_25] : memref<256x1xf32, #tpu.memory_space<vmem>>, vector<8x1xf32>
    %c1_i32_26 = arith.constant 1 : i32
    %68 = tpu.dynamic_rotate %65 by %c1_i32_26 dim 1 : vector<8x256xf32>, i32 -> vector<8x256xf32>
    %cst_27 = arith.constant 0.000000e+00 : f32
    %69 = vector.shape_cast %29 : vector<1x256xi1> to vector<1x256xi1>
    %70 = vector.broadcast %69 : vector<1x256xi1> to vector<8x256xi1>
    %71 = vector.broadcast %cst_27 : f32 to vector<8x256xf32>
    %72 = arith.select %70, %68, %71 : vector<8x256xi1>, vector<8x256xf32>
    %cst_28 = arith.constant 0.000000e+00 : f32
    %73 = vector.shape_cast %42 : vector<1x256xi1> to vector<1x256xi1>
    %74 = vector.broadcast %73 : vector<1x256xi1> to vector<8x256xi1>
    %75 = vector.broadcast %cst_28 : f32 to vector<8x256xf32>
    %76 = arith.select %74, %65, %75 : vector<8x256xi1>, vector<8x256xf32>
    %c255_i32_29 = arith.constant 255 : i32
    %77 = tpu.dynamic_rotate %65 by %c255_i32_29 dim 1 : vector<8x256xf32>, i32 -> vector<8x256xf32>
    %cst_30 = arith.constant 0.000000e+00 : f32
    %78 = vector.shape_cast %56 : vector<1x256xi1> to vector<1x256xi1>
    %79 = vector.broadcast %78 : vector<1x256xi1> to vector<8x256xi1>
    %80 = vector.broadcast %cst_30 : f32 to vector<8x256xf32>
    %81 = arith.select %79, %77, %80 : vector<8x256xi1>, vector<8x256xf32>
    %82 = tpu.concatenate %72, %76, %81 in 0 : vector<8x256xf32>, vector<8x256xf32>, vector<8x256xf32> -> vector<24x256xf32>
    %83 = arith.truncf %82 : vector<24x256xf32> to vector<24x256xbf16>
    %cst_31 = arith.constant dense<0.000000e+00> : vector<8x256xf32>
    %84 = tpu.matmul %66, %83, %cst_31 {dimension_numbers = #tpu.dot_dimension_numbers<[1], [0], [0], [1], [0, 0, 1, 1], [], []>} : vector<8x24xbf16>, vector<24x256xbf16>, vector<8x256xf32> -> vector<8x256xf32>
    %85 = vector.broadcast %67 : vector<8x1xf32> to vector<8x256xf32>
    %86 = arith.addf %84, %85 : vector<8x256xf32>
    %cst_32 = arith.constant 5.000000e-01 : f32
    %87 = vector.broadcast %cst_32 : f32 to vector<8x256xf32>
    %88 = arith.mulf %87, %86 : vector<8x256xf32>
    %cst_33 = arith.constant 0.707106769 : f32
    %89 = vector.broadcast %cst_33 : f32 to vector<8x256xf32>
    %90 = arith.mulf %86, %89 : vector<8x256xf32>
    %91 = math.erf %90 : vector<8x256xf32>
    %cst_34 = arith.constant 1.000000e+00 : f32
    %92 = vector.broadcast %cst_34 : f32 to vector<8x256xf32>
    %93 = arith.addf %92, %91 : vector<8x256xf32>
    %94 = arith.mulf %88, %93 : vector<8x256xf32>
    %c16 = arith.constant 16 : index
    %c0_35 = arith.constant 0 : index
    %95 = vector.load %arg2[%c16, %c0_35] : memref<256x160xbf16, #tpu.memory_space<vmem>>, vector<8x160xbf16>
    %c16_36 = arith.constant 16 : index
    %c0_37 = arith.constant 0 : index
    %96 = vector.load %arg3[%c16_36, %c0_37] : memref<256x1xf32, #tpu.memory_space<vmem>>, vector<8x1xf32>
    %c2_i32 = arith.constant 2 : i32
    %97 = tpu.dynamic_rotate %17 by %c2_i32 dim 1 : vector<32x256xf32>, i32 -> vector<32x256xf32>
    %c-2_i32 = arith.constant -2 : i32
    %98 = vector.broadcast %c-2_i32 : i32 to vector<1x256xi32>
    %99 = arith.addi %16, %98 : vector<1x256xi32>
    %c0_i32_38 = arith.constant 0 : i32
    %100 = vector.broadcast %c0_i32_38 : i32 to vector<1x256xi32>
    %101 = arith.cmpi sge, %99, %100 : vector<1x256xi32>
    %c-2_i32_39 = arith.constant -2 : i32
    %102 = vector.broadcast %c-2_i32_39 : i32 to vector<1x256xi32>
    %103 = arith.addi %16, %102 : vector<1x256xi32>
    %c128_i32_40 = arith.constant 128 : i32
    %104 = vector.broadcast %c128_i32_40 : i32 to vector<1x256xi32>
    %105 = arith.cmpi slt, %103, %104 : vector<1x256xi32>
    %106 = arith.andi %101, %105 : vector<1x256xi1>
    %cst_41 = arith.constant 0.000000e+00 : f32
    %107 = vector.shape_cast %106 : vector<1x256xi1> to vector<1x256xi1>
    %108 = vector.broadcast %107 : vector<1x256xi1> to vector<32x256xi1>
    %109 = vector.broadcast %cst_41 : f32 to vector<32x256xf32>
    %110 = arith.select %108, %97, %109 : vector<32x256xi1>, vector<32x256xf32>
    %c1_i32_42 = arith.constant 1 : i32
    %111 = tpu.dynamic_rotate %17 by %c1_i32_42 dim 1 : vector<32x256xf32>, i32 -> vector<32x256xf32>
    %cst_43 = arith.constant 0.000000e+00 : f32
    %112 = vector.shape_cast %29 : vector<1x256xi1> to vector<1x256xi1>
    %113 = vector.broadcast %112 : vector<1x256xi1> to vector<32x256xi1>
    %114 = vector.broadcast %cst_43 : f32 to vector<32x256xf32>
    %115 = arith.select %113, %111, %114 : vector<32x256xi1>, vector<32x256xf32>
    %cst_44 = arith.constant 0.000000e+00 : f32
    %116 = vector.shape_cast %42 : vector<1x256xi1> to vector<1x256xi1>
    %117 = vector.broadcast %116 : vector<1x256xi1> to vector<32x256xi1>
    %118 = vector.broadcast %cst_44 : f32 to vector<32x256xf32>
    %119 = arith.select %117, %17, %118 : vector<32x256xi1>, vector<32x256xf32>
    %c255_i32_45 = arith.constant 255 : i32
    %120 = tpu.dynamic_rotate %17 by %c255_i32_45 dim 1 : vector<32x256xf32>, i32 -> vector<32x256xf32>
    %cst_46 = arith.constant 0.000000e+00 : f32
    %121 = vector.shape_cast %56 : vector<1x256xi1> to vector<1x256xi1>
    %122 = vector.broadcast %121 : vector<1x256xi1> to vector<32x256xi1>
    %123 = vector.broadcast %cst_46 : f32 to vector<32x256xf32>
    %124 = arith.select %122, %120, %123 : vector<32x256xi1>, vector<32x256xf32>
    %c254_i32 = arith.constant 254 : i32
    %125 = tpu.dynamic_rotate %17 by %c254_i32 dim 1 : vector<32x256xf32>, i32 -> vector<32x256xf32>
    %c2_i32_47 = arith.constant 2 : i32
    %126 = vector.broadcast %c2_i32_47 : i32 to vector<1x256xi32>
    %127 = arith.addi %16, %126 : vector<1x256xi32>
    %c0_i32_48 = arith.constant 0 : i32
    %128 = vector.broadcast %c0_i32_48 : i32 to vector<1x256xi32>
    %129 = arith.cmpi sge, %127, %128 : vector<1x256xi32>
    %c2_i32_49 = arith.constant 2 : i32
    %130 = vector.broadcast %c2_i32_49 : i32 to vector<1x256xi32>
    %131 = arith.addi %16, %130 : vector<1x256xi32>
    %c128_i32_50 = arith.constant 128 : i32
    %132 = vector.broadcast %c128_i32_50 : i32 to vector<1x256xi32>
    %133 = arith.cmpi slt, %131, %132 : vector<1x256xi32>
    %134 = arith.andi %129, %133 : vector<1x256xi1>
    %cst_51 = arith.constant 0.000000e+00 : f32
    %135 = vector.shape_cast %134 : vector<1x256xi1> to vector<1x256xi1>
    %136 = vector.broadcast %135 : vector<1x256xi1> to vector<32x256xi1>
    %137 = vector.broadcast %cst_51 : f32 to vector<32x256xf32>
    %138 = arith.select %136, %125, %137 : vector<32x256xi1>, vector<32x256xf32>
    %139 = tpu.concatenate %110, %115, %119, %124, %138 in 0 : vector<32x256xf32>, vector<32x256xf32>, vector<32x256xf32>, vector<32x256xf32>, vector<32x256xf32> -> vector<160x256xf32>
    %140 = arith.truncf %139 : vector<160x256xf32> to vector<160x256xbf16>
    %cst_52 = arith.constant dense<0.000000e+00> : vector<8x256xf32>
    %141 = tpu.matmul %95, %140, %cst_52 {dimension_numbers = #tpu.dot_dimension_numbers<[1], [0], [0], [1], [0, 0, 1, 1], [], []>} : vector<8x160xbf16>, vector<160x256xbf16>, vector<8x256xf32> -> vector<8x256xf32>
    %142 = vector.broadcast %96 : vector<8x1xf32> to vector<8x256xf32>
    %143 = arith.addf %141, %142 : vector<8x256xf32>
    %c24 = arith.constant 24 : index
    %c0_53 = arith.constant 0 : index
    %144 = vector.load %arg2[%c24, %c0_53] : memref<256x160xbf16, #tpu.memory_space<vmem>>, vector<8x40xbf16>
    %c24_54 = arith.constant 24 : index
    %c0_55 = arith.constant 0 : index
    %145 = vector.load %arg3[%c24_54, %c0_55] : memref<256x1xf32, #tpu.memory_space<vmem>>, vector<8x1xf32>
    %c2_i32_56 = arith.constant 2 : i32
    %146 = tpu.dynamic_rotate %143 by %c2_i32_56 dim 1 : vector<8x256xf32>, i32 -> vector<8x256xf32>
    %cst_57 = arith.constant 0.000000e+00 : f32
    %147 = vector.shape_cast %106 : vector<1x256xi1> to vector<1x256xi1>
    %148 = vector.broadcast %147 : vector<1x256xi1> to vector<8x256xi1>
    %149 = vector.broadcast %cst_57 : f32 to vector<8x256xf32>
    %150 = arith.select %148, %146, %149 : vector<8x256xi1>, vector<8x256xf32>
    %c1_i32_58 = arith.constant 1 : i32
    %151 = tpu.dynamic_rotate %143 by %c1_i32_58 dim 1 : vector<8x256xf32>, i32 -> vector<8x256xf32>
    %cst_59 = arith.constant 0.000000e+00 : f32
    %152 = vector.shape_cast %29 : vector<1x256xi1> to vector<1x256xi1>
    %153 = vector.broadcast %152 : vector<1x256xi1> to vector<8x256xi1>
    %154 = vector.broadcast %cst_59 : f32 to vector<8x256xf32>
    %155 = arith.select %153, %151, %154 : vector<8x256xi1>, vector<8x256xf32>
    %cst_60 = arith.constant 0.000000e+00 : f32
    %156 = vector.shape_cast %42 : vector<1x256xi1> to vector<1x256xi1>
    %157 = vector.broadcast %156 : vector<1x256xi1> to vector<8x256xi1>
    %158 = vector.broadcast %cst_60 : f32 to vector<8x256xf32>
    %159 = arith.select %157, %143, %158 : vector<8x256xi1>, vector<8x256xf32>
    %c255_i32_61 = arith.constant 255 : i32
    %160 = tpu.dynamic_rotate %143 by %c255_i32_61 dim 1 : vector<8x256xf32>, i32 -> vector<8x256xf32>
    %cst_62 = arith.constant 0.000000e+00 : f32
    %161 = vector.shape_cast %56 : vector<1x256xi1> to vector<1x256xi1>
    %162 = vector.broadcast %161 : vector<1x256xi1> to vector<8x256xi1>
    %163 = vector.broadcast %cst_62 : f32 to vector<8x256xf32>
    %164 = arith.select %162, %160, %163 : vector<8x256xi1>, vector<8x256xf32>
    %c254_i32_63 = arith.constant 254 : i32
    %165 = tpu.dynamic_rotate %143 by %c254_i32_63 dim 1 : vector<8x256xf32>, i32 -> vector<8x256xf32>
    %cst_64 = arith.constant 0.000000e+00 : f32
    %166 = vector.shape_cast %134 : vector<1x256xi1> to vector<1x256xi1>
    %167 = vector.broadcast %166 : vector<1x256xi1> to vector<8x256xi1>
    %168 = vector.broadcast %cst_64 : f32 to vector<8x256xf32>
    %169 = arith.select %167, %165, %168 : vector<8x256xi1>, vector<8x256xf32>
    %170 = tpu.concatenate %150, %155, %159, %164, %169 in 0 : vector<8x256xf32>, vector<8x256xf32>, vector<8x256xf32>, vector<8x256xf32>, vector<8x256xf32> -> vector<40x256xf32>
    %171 = arith.truncf %170 : vector<40x256xf32> to vector<40x256xbf16>
    %cst_65 = arith.constant dense<0.000000e+00> : vector<8x256xf32>
    %172 = tpu.matmul %144, %171, %cst_65 {dimension_numbers = #tpu.dot_dimension_numbers<[1], [0], [0], [1], [0, 0, 1, 1], [], []>} : vector<8x40xbf16>, vector<40x256xbf16>, vector<8x256xf32> -> vector<8x256xf32>
    %173 = vector.broadcast %145 : vector<8x1xf32> to vector<8x256xf32>
    %174 = arith.addf %172, %173 : vector<8x256xf32>
    %cst_66 = arith.constant 5.000000e-01 : f32
    %175 = vector.broadcast %cst_66 : f32 to vector<8x256xf32>
    %176 = arith.mulf %175, %174 : vector<8x256xf32>
    %cst_67 = arith.constant 0.707106769 : f32
    %177 = vector.broadcast %cst_67 : f32 to vector<8x256xf32>
    %178 = arith.mulf %174, %177 : vector<8x256xf32>
    %179 = math.erf %178 : vector<8x256xf32>
    %cst_68 = arith.constant 1.000000e+00 : f32
    %180 = vector.broadcast %cst_68 : f32 to vector<8x256xf32>
    %181 = arith.addf %180, %179 : vector<8x256xf32>
    %182 = arith.mulf %176, %181 : vector<8x256xf32>
    %183 = tpu.concatenate %94, %182 in 0 : vector<8x256xf32>, vector<8x256xf32> -> vector<16x256xf32>
    %c1_i32_69 = arith.constant 1 : i32
    %184 = vector.broadcast %c1_i32_69 : i32 to vector<1x256xi32>
    %185 = arith.cmpi sge, %16, %184 : vector<1x256xi32>
    %c1_i32_70 = arith.constant 1 : i32
    %186 = tpu.dynamic_rotate %17 by %c1_i32_70 dim 1 : vector<32x256xf32>, i32 -> vector<32x256xf32>
    %187 = vector.shape_cast %185 : vector<1x256xi1> to vector<1x256xi1>
    %188 = vector.broadcast %187 : vector<1x256xi1> to vector<32x256xi1>
    %189 = arith.select %188, %186, %17 : vector<32x256xi1>, vector<32x256xf32>
    %c126_i32 = arith.constant 126 : i32
    %190 = vector.broadcast %c126_i32 : i32 to vector<1x256xi32>
    %191 = arith.cmpi sle, %16, %190 : vector<1x256xi32>
    %c255_i32_71 = arith.constant 255 : i32
    %192 = tpu.dynamic_rotate %17 by %c255_i32_71 dim 1 : vector<32x256xf32>, i32 -> vector<32x256xf32>
    %193 = vector.shape_cast %191 : vector<1x256xi1> to vector<1x256xi1>
    %194 = vector.broadcast %193 : vector<1x256xi1> to vector<32x256xi1>
    %195 = arith.select %194, %192, %17 : vector<32x256xi1>, vector<32x256xf32>
    %196 = arith.maximumf %17, %189 : vector<32x256xf32>
    %197 = arith.maximumf %196, %195 : vector<32x256xf32>
    %cst_72 = arith.constant 5.000000e-01 : f32
    %198 = vector.broadcast %cst_72 : f32 to vector<32x256xf32>
    %199 = arith.mulf %198, %197 : vector<32x256xf32>
    %cst_73 = arith.constant 0.707106769 : f32
    %200 = vector.broadcast %cst_73 : f32 to vector<32x256xf32>
    %201 = arith.mulf %197, %200 : vector<32x256xf32>
    %202 = math.erf %201 : vector<32x256xf32>
    %cst_74 = arith.constant 1.000000e+00 : f32
    %203 = vector.broadcast %cst_74 : f32 to vector<32x256xf32>
    %204 = arith.addf %203, %202 : vector<32x256xf32>
    %205 = arith.mulf %199, %204 : vector<32x256xf32>
    %c32 = arith.constant 32 : index
    %c0_75 = arith.constant 0 : index
    %206 = vector.load %arg2[%c32, %c0_75] : memref<256x160xbf16, #tpu.memory_space<vmem>>, vector<8x32xbf16>
    %c32_76 = arith.constant 32 : index
    %c0_77 = arith.constant 0 : index
    %207 = vector.load %arg3[%c32_76, %c0_77] : memref<256x1xf32, #tpu.memory_space<vmem>>, vector<8x1xf32>
    %208 = arith.truncf %205 : vector<32x256xf32> to vector<32x256xbf16>
    %cst_78 = arith.constant dense<0.000000e+00> : vector<8x256xf32>
    %209 = tpu.matmul %206, %208, %cst_78 {dimension_numbers = #tpu.dot_dimension_numbers<[1], [0], [0], [1], [0, 0, 1, 1], [], []>} : vector<8x32xbf16>, vector<32x256xbf16>, vector<8x256xf32> -> vector<8x256xf32>
    %210 = vector.broadcast %207 : vector<8x1xf32> to vector<8x256xf32>
    %211 = arith.addf %209, %210 : vector<8x256xf32>
    %212 = tpu.concatenate %183, %211 in 0 : vector<16x256xf32>, vector<8x256xf32> -> vector<24x256xf32>
    %c40 = arith.constant 40 : index
    %c0_79 = arith.constant 0 : index
    %213 = vector.load %arg2[%c40, %c0_79] : memref<256x160xbf16, #tpu.memory_space<vmem>>, vector<32x72xbf16>
    %c40_80 = arith.constant 40 : index
    %c0_81 = arith.constant 0 : index
    %214 = vector.load %arg3[%c40_80, %c0_81] : memref<256x1xf32, #tpu.memory_space<vmem>>, vector<32x1xf32>
    %c1_i32_82 = arith.constant 1 : i32
    %215 = tpu.dynamic_rotate %212 by %c1_i32_82 dim 1 : vector<24x256xf32>, i32 -> vector<24x256xf32>
    %cst_83 = arith.constant 0.000000e+00 : f32
    %216 = vector.shape_cast %29 : vector<1x256xi1> to vector<1x256xi1>
    %217 = vector.broadcast %216 : vector<1x256xi1> to vector<24x256xi1>
    %218 = vector.broadcast %cst_83 : f32 to vector<24x256xf32>
    %219 = arith.select %217, %215, %218 : vector<24x256xi1>, vector<24x256xf32>
    %cst_84 = arith.constant 0.000000e+00 : f32
    %220 = vector.shape_cast %42 : vector<1x256xi1> to vector<1x256xi1>
    %221 = vector.broadcast %220 : vector<1x256xi1> to vector<24x256xi1>
    %222 = vector.broadcast %cst_84 : f32 to vector<24x256xf32>
    %223 = arith.select %221, %212, %222 : vector<24x256xi1>, vector<24x256xf32>
    %c255_i32_85 = arith.constant 255 : i32
    %224 = tpu.dynamic_rotate %212 by %c255_i32_85 dim 1 : vector<24x256xf32>, i32 -> vector<24x256xf32>
    %cst_86 = arith.constant 0.000000e+00 : f32
    %225 = vector.shape_cast %56 : vector<1x256xi1> to vector<1x256xi1>
    %226 = vector.broadcast %225 : vector<1x256xi1> to vector<24x256xi1>
    %227 = vector.broadcast %cst_86 : f32 to vector<24x256xf32>
    %228 = arith.select %226, %224, %227 : vector<24x256xi1>, vector<24x256xf32>
    %229 = tpu.concatenate %219, %223, %228 in 0 : vector<24x256xf32>, vector<24x256xf32>, vector<24x256xf32> -> vector<72x256xf32>
    %230 = arith.truncf %229 : vector<72x256xf32> to vector<72x256xbf16>
    %cst_87 = arith.constant dense<0.000000e+00> : vector<32x256xf32>
    %231 = tpu.matmul %213, %230, %cst_87 {dimension_numbers = #tpu.dot_dimension_numbers<[1], [0], [0], [1], [0, 0, 1, 1], [], []>} : vector<32x72xbf16>, vector<72x256xbf16>, vector<32x256xf32> -> vector<32x256xf32>
    %232 = vector.broadcast %214 : vector<32x1xf32> to vector<32x256xf32>
    %233 = arith.addf %231, %232 : vector<32x256xf32>
    %234 = arith.addf %233, %17 : vector<32x256xf32>
    %c72 = arith.constant 72 : index
    %c0_88 = arith.constant 0 : index
    %235 = vector.load %arg2[%c72, %c0_88] : memref<256x160xbf16, #tpu.memory_space<vmem>>, vector<8x96xbf16>
    %c72_89 = arith.constant 72 : index
    %c0_90 = arith.constant 0 : index
    %236 = vector.load %arg3[%c72_89, %c0_90] : memref<256x1xf32, #tpu.memory_space<vmem>>, vector<8x1xf32>
    %c5_i32 = arith.constant 5 : i32
    %237 = tpu.dynamic_rotate %234 by %c5_i32 dim 1 : vector<32x256xf32>, i32 -> vector<32x256xf32>
    %c-5_i32 = arith.constant -5 : i32
    %238 = vector.broadcast %c-5_i32 : i32 to vector<1x256xi32>
    %239 = arith.addi %16, %238 : vector<1x256xi32>
    %c0_i32_91 = arith.constant 0 : i32
    %240 = vector.broadcast %c0_i32_91 : i32 to vector<1x256xi32>
    %241 = arith.cmpi sge, %239, %240 : vector<1x256xi32>
    %c-5_i32_92 = arith.constant -5 : i32
    %242 = vector.broadcast %c-5_i32_92 : i32 to vector<1x256xi32>
    %243 = arith.addi %16, %242 : vector<1x256xi32>
    %c128_i32_93 = arith.constant 128 : i32
    %244 = vector.broadcast %c128_i32_93 : i32 to vector<1x256xi32>
    %245 = arith.cmpi slt, %243, %244 : vector<1x256xi32>
    %246 = arith.andi %241, %245 : vector<1x256xi1>
    %cst_94 = arith.constant 0.000000e+00 : f32
    %247 = vector.shape_cast %246 : vector<1x256xi1> to vector<1x256xi1>
    %248 = vector.broadcast %247 : vector<1x256xi1> to vector<32x256xi1>
    %249 = vector.broadcast %cst_94 : f32 to vector<32x256xf32>
    %250 = arith.select %248, %237, %249 : vector<32x256xi1>, vector<32x256xf32>
    %cst_95 = arith.constant 0.000000e+00 : f32
    %251 = vector.shape_cast %42 : vector<1x256xi1> to vector<1x256xi1>
    %252 = vector.broadcast %251 : vector<1x256xi1> to vector<32x256xi1>
    %253 = vector.broadcast %cst_95 : f32 to vector<32x256xf32>
    %254 = arith.select %252, %234, %253 : vector<32x256xi1>, vector<32x256xf32>
    %c251_i32 = arith.constant 251 : i32
    %255 = tpu.dynamic_rotate %234 by %c251_i32 dim 1 : vector<32x256xf32>, i32 -> vector<32x256xf32>
    %c5_i32_96 = arith.constant 5 : i32
    %256 = vector.broadcast %c5_i32_96 : i32 to vector<1x256xi32>
    %257 = arith.addi %16, %256 : vector<1x256xi32>
    %c0_i32_97 = arith.constant 0 : i32
    %258 = vector.broadcast %c0_i32_97 : i32 to vector<1x256xi32>
    %259 = arith.cmpi sge, %257, %258 : vector<1x256xi32>
    %c5_i32_98 = arith.constant 5 : i32
    %260 = vector.broadcast %c5_i32_98 : i32 to vector<1x256xi32>
    %261 = arith.addi %16, %260 : vector<1x256xi32>
    %c128_i32_99 = arith.constant 128 : i32
    %262 = vector.broadcast %c128_i32_99 : i32 to vector<1x256xi32>
    %263 = arith.cmpi slt, %261, %262 : vector<1x256xi32>
    %264 = arith.andi %259, %263 : vector<1x256xi1>
    %cst_100 = arith.constant 0.000000e+00 : f32
    %265 = vector.shape_cast %264 : vector<1x256xi1> to vector<1x256xi1>
    %266 = vector.broadcast %265 : vector<1x256xi1> to vector<32x256xi1>
    %267 = vector.broadcast %cst_100 : f32 to vector<32x256xf32>
    %268 = arith.select %266, %255, %267 : vector<32x256xi1>, vector<32x256xf32>
    %269 = tpu.concatenate %250, %254, %268 in 0 : vector<32x256xf32>, vector<32x256xf32>, vector<32x256xf32> -> vector<96x256xf32>
    %270 = arith.truncf %269 : vector<96x256xf32> to vector<96x256xbf16>
    %cst_101 = arith.constant dense<0.000000e+00> : vector<8x256xf32>
    %271 = tpu.matmul %235, %270, %cst_101 {dimension_numbers = #tpu.dot_dimension_numbers<[1], [0], [0], [1], [0, 0, 1, 1], [], []>} : vector<8x96xbf16>, vector<96x256xbf16>, vector<8x256xf32> -> vector<8x256xf32>
    %272 = vector.broadcast %236 : vector<8x1xf32> to vector<8x256xf32>
    %273 = arith.addf %271, %272 : vector<8x256xf32>
    %c80 = arith.constant 80 : index
    %c0_102 = arith.constant 0 : index
    %274 = vector.load %arg2[%c80, %c0_102] : memref<256x160xbf16, #tpu.memory_space<vmem>>, vector<8x24xbf16>
    %c80_103 = arith.constant 80 : index
    %c0_104 = arith.constant 0 : index
    %275 = vector.load %arg3[%c80_103, %c0_104] : memref<256x1xf32, #tpu.memory_space<vmem>>, vector<8x1xf32>
    %c5_i32_105 = arith.constant 5 : i32
    %276 = tpu.dynamic_rotate %273 by %c5_i32_105 dim 1 : vector<8x256xf32>, i32 -> vector<8x256xf32>
    %cst_106 = arith.constant 0.000000e+00 : f32
    %277 = vector.shape_cast %246 : vector<1x256xi1> to vector<1x256xi1>
    %278 = vector.broadcast %277 : vector<1x256xi1> to vector<8x256xi1>
    %279 = vector.broadcast %cst_106 : f32 to vector<8x256xf32>
    %280 = arith.select %278, %276, %279 : vector<8x256xi1>, vector<8x256xf32>
    %cst_107 = arith.constant 0.000000e+00 : f32
    %281 = vector.shape_cast %42 : vector<1x256xi1> to vector<1x256xi1>
    %282 = vector.broadcast %281 : vector<1x256xi1> to vector<8x256xi1>
    %283 = vector.broadcast %cst_107 : f32 to vector<8x256xf32>
    %284 = arith.select %282, %273, %283 : vector<8x256xi1>, vector<8x256xf32>
    %c251_i32_108 = arith.constant 251 : i32
    %285 = tpu.dynamic_rotate %273 by %c251_i32_108 dim 1 : vector<8x256xf32>, i32 -> vector<8x256xf32>
    %cst_109 = arith.constant 0.000000e+00 : f32
    %286 = vector.shape_cast %264 : vector<1x256xi1> to vector<1x256xi1>
    %287 = vector.broadcast %286 : vector<1x256xi1> to vector<8x256xi1>
    %288 = vector.broadcast %cst_109 : f32 to vector<8x256xf32>
    %289 = arith.select %287, %285, %288 : vector<8x256xi1>, vector<8x256xf32>
    %290 = tpu.concatenate %280, %284, %289 in 0 : vector<8x256xf32>, vector<8x256xf32>, vector<8x256xf32> -> vector<24x256xf32>
    %291 = arith.truncf %290 : vector<24x256xf32> to vector<24x256xbf16>
    %cst_110 = arith.constant dense<0.000000e+00> : vector<8x256xf32>
    %292 = tpu.matmul %274, %291, %cst_110 {dimension_numbers = #tpu.dot_dimension_numbers<[1], [0], [0], [1], [0, 0, 1, 1], [], []>} : vector<8x24xbf16>, vector<24x256xbf16>, vector<8x256xf32> -> vector<8x256xf32>
    %293 = vector.broadcast %275 : vector<8x1xf32> to vector<8x256xf32>
    %294 = arith.addf %292, %293 : vector<8x256xf32>
    %cst_111 = arith.constant 5.000000e-01 : f32
    %295 = vector.broadcast %cst_111 : f32 to vector<8x256xf32>
    %296 = arith.mulf %295, %294 : vector<8x256xf32>
    %cst_112 = arith.constant 0.707106769 : f32
    %297 = vector.broadcast %cst_112 : f32 to vector<8x256xf32>
    %298 = arith.mulf %294, %297 : vector<8x256xf32>
    %299 = math.erf %298 : vector<8x256xf32>
    %cst_113 = arith.constant 1.000000e+00 : f32
    %300 = vector.broadcast %cst_113 : f32 to vector<8x256xf32>
    %301 = arith.addf %300, %299 : vector<8x256xf32>
    %302 = arith.mulf %296, %301 : vector<8x256xf32>
    %c88 = arith.constant 88 : index
    %c0_114 = arith.constant 0 : index
    %303 = vector.load %arg2[%c88, %c0_114] : memref<256x160xbf16, #tpu.memory_space<vmem>>, vector<8x160xbf16>
    %c88_115 = arith.constant 88 : index
    %c0_116 = arith.constant 0 : index
    %304 = vector.load %arg3[%c88_115, %c0_116] : memref<256x1xf32, #tpu.memory_space<vmem>>, vector<8x1xf32>
    %c18_i32 = arith.constant 18 : i32
    %305 = tpu.dynamic_rotate %234 by %c18_i32 dim 1 : vector<32x256xf32>, i32 -> vector<32x256xf32>
    %c-18_i32 = arith.constant -18 : i32
    %306 = vector.broadcast %c-18_i32 : i32 to vector<1x256xi32>
    %307 = arith.addi %16, %306 : vector<1x256xi32>
    %c0_i32_117 = arith.constant 0 : i32
    %308 = vector.broadcast %c0_i32_117 : i32 to vector<1x256xi32>
    %309 = arith.cmpi sge, %307, %308 : vector<1x256xi32>
    %c-18_i32_118 = arith.constant -18 : i32
    %310 = vector.broadcast %c-18_i32_118 : i32 to vector<1x256xi32>
    %311 = arith.addi %16, %310 : vector<1x256xi32>
    %c128_i32_119 = arith.constant 128 : i32
    %312 = vector.broadcast %c128_i32_119 : i32 to vector<1x256xi32>
    %313 = arith.cmpi slt, %311, %312 : vector<1x256xi32>
    %314 = arith.andi %309, %313 : vector<1x256xi1>
    %cst_120 = arith.constant 0.000000e+00 : f32
    %315 = vector.shape_cast %314 : vector<1x256xi1> to vector<1x256xi1>
    %316 = vector.broadcast %315 : vector<1x256xi1> to vector<32x256xi1>
    %317 = vector.broadcast %cst_120 : f32 to vector<32x256xf32>
    %318 = arith.select %316, %305, %317 : vector<32x256xi1>, vector<32x256xf32>
    %c9_i32 = arith.constant 9 : i32
    %319 = tpu.dynamic_rotate %234 by %c9_i32 dim 1 : vector<32x256xf32>, i32 -> vector<32x256xf32>
    %c-9_i32 = arith.constant -9 : i32
    %320 = vector.broadcast %c-9_i32 : i32 to vector<1x256xi32>
    %321 = arith.addi %16, %320 : vector<1x256xi32>
    %c0_i32_121 = arith.constant 0 : i32
    %322 = vector.broadcast %c0_i32_121 : i32 to vector<1x256xi32>
    %323 = arith.cmpi sge, %321, %322 : vector<1x256xi32>
    %c-9_i32_122 = arith.constant -9 : i32
    %324 = vector.broadcast %c-9_i32_122 : i32 to vector<1x256xi32>
    %325 = arith.addi %16, %324 : vector<1x256xi32>
    %c128_i32_123 = arith.constant 128 : i32
    %326 = vector.broadcast %c128_i32_123 : i32 to vector<1x256xi32>
    %327 = arith.cmpi slt, %325, %326 : vector<1x256xi32>
    %328 = arith.andi %323, %327 : vector<1x256xi1>
    %cst_124 = arith.constant 0.000000e+00 : f32
    %329 = vector.shape_cast %328 : vector<1x256xi1> to vector<1x256xi1>
    %330 = vector.broadcast %329 : vector<1x256xi1> to vector<32x256xi1>
    %331 = vector.broadcast %cst_124 : f32 to vector<32x256xf32>
    %332 = arith.select %330, %319, %331 : vector<32x256xi1>, vector<32x256xf32>
    %cst_125 = arith.constant 0.000000e+00 : f32
    %333 = vector.shape_cast %42 : vector<1x256xi1> to vector<1x256xi1>
    %334 = vector.broadcast %333 : vector<1x256xi1> to vector<32x256xi1>
    %335 = vector.broadcast %cst_125 : f32 to vector<32x256xf32>
    %336 = arith.select %334, %234, %335 : vector<32x256xi1>, vector<32x256xf32>
    %c247_i32 = arith.constant 247 : i32
    %337 = tpu.dynamic_rotate %234 by %c247_i32 dim 1 : vector<32x256xf32>, i32 -> vector<32x256xf32>
    %c9_i32_126 = arith.constant 9 : i32
    %338 = vector.broadcast %c9_i32_126 : i32 to vector<1x256xi32>
    %339 = arith.addi %16, %338 : vector<1x256xi32>
    %c0_i32_127 = arith.constant 0 : i32
    %340 = vector.broadcast %c0_i32_127 : i32 to vector<1x256xi32>
    %341 = arith.cmpi sge, %339, %340 : vector<1x256xi32>
    %c9_i32_128 = arith.constant 9 : i32
    %342 = vector.broadcast %c9_i32_128 : i32 to vector<1x256xi32>
    %343 = arith.addi %16, %342 : vector<1x256xi32>
    %c128_i32_129 = arith.constant 128 : i32
    %344 = vector.broadcast %c128_i32_129 : i32 to vector<1x256xi32>
    %345 = arith.cmpi slt, %343, %344 : vector<1x256xi32>
    %346 = arith.andi %341, %345 : vector<1x256xi1>
    %cst_130 = arith.constant 0.000000e+00 : f32
    %347 = vector.shape_cast %346 : vector<1x256xi1> to vector<1x256xi1>
    %348 = vector.broadcast %347 : vector<1x256xi1> to vector<32x256xi1>
    %349 = vector.broadcast %cst_130 : f32 to vector<32x256xf32>
    %350 = arith.select %348, %337, %349 : vector<32x256xi1>, vector<32x256xf32>
    %c238_i32 = arith.constant 238 : i32
    %351 = tpu.dynamic_rotate %234 by %c238_i32 dim 1 : vector<32x256xf32>, i32 -> vector<32x256xf32>
    %c18_i32_131 = arith.constant 18 : i32
    %352 = vector.broadcast %c18_i32_131 : i32 to vector<1x256xi32>
    %353 = arith.addi %16, %352 : vector<1x256xi32>
    %c0_i32_132 = arith.constant 0 : i32
    %354 = vector.broadcast %c0_i32_132 : i32 to vector<1x256xi32>
    %355 = arith.cmpi sge, %353, %354 : vector<1x256xi32>
    %c18_i32_133 = arith.constant 18 : i32
    %356 = vector.broadcast %c18_i32_133 : i32 to vector<1x256xi32>
    %357 = arith.addi %16, %356 : vector<1x256xi32>
    %c128_i32_134 = arith.constant 128 : i32
    %358 = vector.broadcast %c128_i32_134 : i32 to vector<1x256xi32>
    %359 = arith.cmpi slt, %357, %358 : vector<1x256xi32>
    %360 = arith.andi %355, %359 : vector<1x256xi1>
    %cst_135 = arith.constant 0.000000e+00 : f32
    %361 = vector.shape_cast %360 : vector<1x256xi1> to vector<1x256xi1>
    %362 = vector.broadcast %361 : vector<1x256xi1> to vector<32x256xi1>
    %363 = vector.broadcast %cst_135 : f32 to vector<32x256xf32>
    %364 = arith.select %362, %351, %363 : vector<32x256xi1>, vector<32x256xf32>
    %365 = tpu.concatenate %318, %332, %336, %350, %364 in 0 : vector<32x256xf32>, vector<32x256xf32>, vector<32x256xf32>, vector<32x256xf32>, vector<32x256xf32> -> vector<160x256xf32>
    %366 = arith.truncf %365 : vector<160x256xf32> to vector<160x256xbf16>
    %cst_136 = arith.constant dense<0.000000e+00> : vector<8x256xf32>
    %367 = tpu.matmul %303, %366, %cst_136 {dimension_numbers = #tpu.dot_dimension_numbers<[1], [0], [0], [1], [0, 0, 1, 1], [], []>} : vector<8x160xbf16>, vector<160x256xbf16>, vector<8x256xf32> -> vector<8x256xf32>
    %368 = vector.broadcast %304 : vector<8x1xf32> to vector<8x256xf32>
    %369 = arith.addf %367, %368 : vector<8x256xf32>
    %c96 = arith.constant 96 : index
    %c0_137 = arith.constant 0 : index
    %370 = vector.load %arg2[%c96, %c0_137] : memref<256x160xbf16, #tpu.memory_space<vmem>>, vector<8x40xbf16>
    %c96_138 = arith.constant 96 : index
    %c0_139 = arith.constant 0 : index
    %371 = vector.load %arg3[%c96_138, %c0_139] : memref<256x1xf32, #tpu.memory_space<vmem>>, vector<8x1xf32>
    %c18_i32_140 = arith.constant 18 : i32
    %372 = tpu.dynamic_rotate %369 by %c18_i32_140 dim 1 : vector<8x256xf32>, i32 -> vector<8x256xf32>
    %cst_141 = arith.constant 0.000000e+00 : f32
    %373 = vector.shape_cast %314 : vector<1x256xi1> to vector<1x256xi1>
    %374 = vector.broadcast %373 : vector<1x256xi1> to vector<8x256xi1>
    %375 = vector.broadcast %cst_141 : f32 to vector<8x256xf32>
    %376 = arith.select %374, %372, %375 : vector<8x256xi1>, vector<8x256xf32>
    %c9_i32_142 = arith.constant 9 : i32
    %377 = tpu.dynamic_rotate %369 by %c9_i32_142 dim 1 : vector<8x256xf32>, i32 -> vector<8x256xf32>
    %cst_143 = arith.constant 0.000000e+00 : f32
    %378 = vector.shape_cast %328 : vector<1x256xi1> to vector<1x256xi1>
    %379 = vector.broadcast %378 : vector<1x256xi1> to vector<8x256xi1>
    %380 = vector.broadcast %cst_143 : f32 to vector<8x256xf32>
    %381 = arith.select %379, %377, %380 : vector<8x256xi1>, vector<8x256xf32>
    %cst_144 = arith.constant 0.000000e+00 : f32
    %382 = vector.shape_cast %42 : vector<1x256xi1> to vector<1x256xi1>
    %383 = vector.broadcast %382 : vector<1x256xi1> to vector<8x256xi1>
    %384 = vector.broadcast %cst_144 : f32 to vector<8x256xf32>
    %385 = arith.select %383, %369, %384 : vector<8x256xi1>, vector<8x256xf32>
    %c247_i32_145 = arith.constant 247 : i32
    %386 = tpu.dynamic_rotate %369 by %c247_i32_145 dim 1 : vector<8x256xf32>, i32 -> vector<8x256xf32>
    %cst_146 = arith.constant 0.000000e+00 : f32
    %387 = vector.shape_cast %346 : vector<1x256xi1> to vector<1x256xi1>
    %388 = vector.broadcast %387 : vector<1x256xi1> to vector<8x256xi1>
    %389 = vector.broadcast %cst_146 : f32 to vector<8x256xf32>
    %390 = arith.select %388, %386, %389 : vector<8x256xi1>, vector<8x256xf32>
    %c238_i32_147 = arith.constant 238 : i32
    %391 = tpu.dynamic_rotate %369 by %c238_i32_147 dim 1 : vector<8x256xf32>, i32 -> vector<8x256xf32>
    %cst_148 = arith.constant 0.000000e+00 : f32
    %392 = vector.shape_cast %360 : vector<1x256xi1> to vector<1x256xi1>
    %393 = vector.broadcast %392 : vector<1x256xi1> to vector<8x256xi1>
    %394 = vector.broadcast %cst_148 : f32 to vector<8x256xf32>
    %395 = arith.select %393, %391, %394 : vector<8x256xi1>, vector<8x256xf32>
    %396 = tpu.concatenate %376, %381, %385, %390, %395 in 0 : vector<8x256xf32>, vector<8x256xf32>, vector<8x256xf32>, vector<8x256xf32>, vector<8x256xf32> -> vector<40x256xf32>
    %397 = arith.truncf %396 : vector<40x256xf32> to vector<40x256xbf16>
    %cst_149 = arith.constant dense<0.000000e+00> : vector<8x256xf32>
    %398 = tpu.matmul %370, %397, %cst_149 {dimension_numbers = #tpu.dot_dimension_numbers<[1], [0], [0], [1], [0, 0, 1, 1], [], []>} : vector<8x40xbf16>, vector<40x256xbf16>, vector<8x256xf32> -> vector<8x256xf32>
    %399 = vector.broadcast %371 : vector<8x1xf32> to vector<8x256xf32>
    %400 = arith.addf %398, %399 : vector<8x256xf32>
    %cst_150 = arith.constant 5.000000e-01 : f32
    %401 = vector.broadcast %cst_150 : f32 to vector<8x256xf32>
    %402 = arith.mulf %401, %400 : vector<8x256xf32>
    %cst_151 = arith.constant 0.707106769 : f32
    %403 = vector.broadcast %cst_151 : f32 to vector<8x256xf32>
    %404 = arith.mulf %400, %403 : vector<8x256xf32>
    %405 = math.erf %404 : vector<8x256xf32>
    %cst_152 = arith.constant 1.000000e+00 : f32
    %406 = vector.broadcast %cst_152 : f32 to vector<8x256xf32>
    %407 = arith.addf %406, %405 : vector<8x256xf32>
    %408 = arith.mulf %402, %407 : vector<8x256xf32>
    %409 = tpu.concatenate %302, %408 in 0 : vector<8x256xf32>, vector<8x256xf32> -> vector<16x256xf32>
    %c112 = arith.constant 112 : index
    %c0_153 = arith.constant 0 : index
    %410 = vector.load %arg2[%c112, %c0_153] : memref<256x160xbf16, #tpu.memory_space<vmem>>, vector<16x16xbf16>
    %c112_154 = arith.constant 112 : index
    %c0_155 = arith.constant 0 : index
    %411 = vector.load %arg3[%c112_154, %c0_155] : memref<256x1xf32, #tpu.memory_space<vmem>>, vector<16x1xf32>
    %412 = arith.truncf %183 : vector<16x256xf32> to vector<16x256xbf16>
    %cst_156 = arith.constant dense<0.000000e+00> : vector<16x256xf32>
    %413 = tpu.matmul %410, %412, %cst_156 {dimension_numbers = #tpu.dot_dimension_numbers<[1], [0], [0], [1], [0, 0, 1, 1], [], []>} : vector<16x16xbf16>, vector<16x256xbf16>, vector<16x256xf32> -> vector<16x256xf32>
    %414 = vector.broadcast %411 : vector<16x1xf32> to vector<16x256xf32>
    %415 = arith.addf %413, %414 : vector<16x256xf32>
    %416 = arith.addf %409, %415 : vector<16x256xf32>
    %c1_i32_157 = arith.constant 1 : i32
    %417 = vector.broadcast %c1_i32_157 : i32 to vector<1x256xi32>
    %418 = arith.cmpi sge, %16, %417 : vector<1x256xi32>
    %c1_i32_158 = arith.constant 1 : i32
    %419 = tpu.dynamic_rotate %234 by %c1_i32_158 dim 1 : vector<32x256xf32>, i32 -> vector<32x256xf32>
    %420 = vector.shape_cast %418 : vector<1x256xi1> to vector<1x256xi1>
    %421 = vector.broadcast %420 : vector<1x256xi1> to vector<32x256xi1>
    %422 = arith.select %421, %419, %234 : vector<32x256xi1>, vector<32x256xf32>
    %c126_i32_159 = arith.constant 126 : i32
    %423 = vector.broadcast %c126_i32_159 : i32 to vector<1x256xi32>
    %424 = arith.cmpi sle, %16, %423 : vector<1x256xi32>
    %c255_i32_160 = arith.constant 255 : i32
    %425 = tpu.dynamic_rotate %234 by %c255_i32_160 dim 1 : vector<32x256xf32>, i32 -> vector<32x256xf32>
    %426 = vector.shape_cast %424 : vector<1x256xi1> to vector<1x256xi1>
    %427 = vector.broadcast %426 : vector<1x256xi1> to vector<32x256xi1>
    %428 = arith.select %427, %425, %234 : vector<32x256xi1>, vector<32x256xf32>
    %429 = arith.maximumf %234, %422 : vector<32x256xf32>
    %430 = arith.maximumf %429, %428 : vector<32x256xf32>
    %cst_161 = arith.constant 5.000000e-01 : f32
    %431 = vector.broadcast %cst_161 : f32 to vector<32x256xf32>
    %432 = arith.mulf %431, %430 : vector<32x256xf32>
    %cst_162 = arith.constant 0.707106769 : f32
    %433 = vector.broadcast %cst_162 : f32 to vector<32x256xf32>
    %434 = arith.mulf %430, %433 : vector<32x256xf32>
    %435 = math.erf %434 : vector<32x256xf32>
    %cst_163 = arith.constant 1.000000e+00 : f32
    %436 = vector.broadcast %cst_163 : f32 to vector<32x256xf32>
    %437 = arith.addf %436, %435 : vector<32x256xf32>
    %438 = arith.mulf %432, %437 : vector<32x256xf32>
    %c104 = arith.constant 104 : index
    %c0_164 = arith.constant 0 : index
    %439 = vector.load %arg2[%c104, %c0_164] : memref<256x160xbf16, #tpu.memory_space<vmem>>, vector<8x32xbf16>
    %c104_165 = arith.constant 104 : index
    %c0_166 = arith.constant 0 : index
    %440 = vector.load %arg3[%c104_165, %c0_166] : memref<256x1xf32, #tpu.memory_space<vmem>>, vector<8x1xf32>
    %441 = arith.truncf %438 : vector<32x256xf32> to vector<32x256xbf16>
    %cst_167 = arith.constant dense<0.000000e+00> : vector<8x256xf32>
    %442 = tpu.matmul %439, %441, %cst_167 {dimension_numbers = #tpu.dot_dimension_numbers<[1], [0], [0], [1], [0, 0, 1, 1], [], []>} : vector<8x32xbf16>, vector<32x256xbf16>, vector<8x256xf32> -> vector<8x256xf32>
    %443 = vector.broadcast %440 : vector<8x1xf32> to vector<8x256xf32>
    %444 = arith.addf %442, %443 : vector<8x256xf32>
    %445 = tpu.concatenate %416, %444 in 0 : vector<16x256xf32>, vector<8x256xf32> -> vector<24x256xf32>
    %c128 = arith.constant 128 : index
    %c0_168 = arith.constant 0 : index
    %446 = vector.load %arg2[%c128, %c0_168] : memref<256x160xbf16, #tpu.memory_space<vmem>>, vector<64x72xbf16>
    %c128_169 = arith.constant 128 : index
    %c0_170 = arith.constant 0 : index
    %447 = vector.load %arg3[%c128_169, %c0_170] : memref<256x1xf32, #tpu.memory_space<vmem>>, vector<64x1xf32>
    %c1_i32_171 = arith.constant 1 : i32
    %448 = tpu.dynamic_rotate %445 by %c1_i32_171 dim 1 : vector<24x256xf32>, i32 -> vector<24x256xf32>
    %cst_172 = arith.constant 0.000000e+00 : f32
    %449 = vector.shape_cast %29 : vector<1x256xi1> to vector<1x256xi1>
    %450 = vector.broadcast %449 : vector<1x256xi1> to vector<24x256xi1>
    %451 = vector.broadcast %cst_172 : f32 to vector<24x256xf32>
    %452 = arith.select %450, %448, %451 : vector<24x256xi1>, vector<24x256xf32>
    %cst_173 = arith.constant 0.000000e+00 : f32
    %453 = vector.shape_cast %42 : vector<1x256xi1> to vector<1x256xi1>
    %454 = vector.broadcast %453 : vector<1x256xi1> to vector<24x256xi1>
    %455 = vector.broadcast %cst_173 : f32 to vector<24x256xf32>
    %456 = arith.select %454, %445, %455 : vector<24x256xi1>, vector<24x256xf32>
    %c255_i32_174 = arith.constant 255 : i32
    %457 = tpu.dynamic_rotate %445 by %c255_i32_174 dim 1 : vector<24x256xf32>, i32 -> vector<24x256xf32>
    %cst_175 = arith.constant 0.000000e+00 : f32
    %458 = vector.shape_cast %56 : vector<1x256xi1> to vector<1x256xi1>
    %459 = vector.broadcast %458 : vector<1x256xi1> to vector<24x256xi1>
    %460 = vector.broadcast %cst_175 : f32 to vector<24x256xf32>
    %461 = arith.select %459, %457, %460 : vector<24x256xi1>, vector<24x256xf32>
    %462 = tpu.concatenate %452, %456, %461 in 0 : vector<24x256xf32>, vector<24x256xf32>, vector<24x256xf32> -> vector<72x256xf32>
    %463 = arith.truncf %462 : vector<72x256xf32> to vector<72x256xbf16>
    %cst_176 = arith.constant dense<0.000000e+00> : vector<64x256xf32>
    %464 = tpu.matmul %446, %463, %cst_176 {dimension_numbers = #tpu.dot_dimension_numbers<[1], [0], [0], [1], [0, 0, 1, 1], [], []>} : vector<64x72xbf16>, vector<72x256xbf16>, vector<64x256xf32> -> vector<64x256xf32>
    %465 = vector.broadcast %447 : vector<64x1xf32> to vector<64x256xf32>
    %466 = arith.addf %464, %465 : vector<64x256xf32>
    %c192 = arith.constant 192 : index
    %c0_177 = arith.constant 0 : index
    %467 = vector.load %arg2[%c192, %c0_177] : memref<256x160xbf16, #tpu.memory_space<vmem>>, vector<64x32xbf16>
    %c192_178 = arith.constant 192 : index
    %c0_179 = arith.constant 0 : index
    %468 = vector.load %arg3[%c192_178, %c0_179] : memref<256x1xf32, #tpu.memory_space<vmem>>, vector<64x1xf32>
    %469 = arith.truncf %234 : vector<32x256xf32> to vector<32x256xbf16>
    %cst_180 = arith.constant dense<0.000000e+00> : vector<64x256xf32>
    %470 = tpu.matmul %467, %469, %cst_180 {dimension_numbers = #tpu.dot_dimension_numbers<[1], [0], [0], [1], [0, 0, 1, 1], [], []>} : vector<64x32xbf16>, vector<32x256xbf16>, vector<64x256xf32> -> vector<64x256xf32>
    %471 = vector.broadcast %468 : vector<64x1xf32> to vector<64x256xf32>
    %472 = arith.addf %470, %471 : vector<64x256xf32>
    %473 = arith.addf %466, %472 : vector<64x256xf32>
    %c0_181 = arith.constant 0 : index
    %c0_182 = arith.constant 0 : index
    %474 = vector.load %arg4[%c0_181, %c0_182] : memref<64x256xf32, #tpu.memory_space<vmem>>, vector<64x256xf32>
    tpu.vector_store %arg4[%c0_181, %c0_182], %473 {strides = array<i32>} : memref<64x256xf32, #tpu.memory_space<vmem>>, vector<64x256xf32>,
    return
  }
  func.func @transform_0(%arg0: i32) -> (i32, i32) {
    %c0_i32 = arith.constant 0 : i32
    %c0_i32_0 = arith.constant 0 : i32
    return %c0_i32, %arg0 : i32, i32
  }
  func.func @transform_1(%arg0: i32) -> (i32, i32) {
    %c0_i32 = arith.constant 0 : i32
    %c0_i32_0 = arith.constant 0 : i32
    %c0_i32_1 = arith.constant 0 : i32
    return %c0_i32, %c0_i32_0 : i32, i32
  }
  func.func @transform_2(%arg0: i32) -> (i32, i32) {
    %c0_i32 = arith.constant 0 : i32
    %c0_i32_0 = arith.constant 0 : i32
    %c0_i32_1 = arith.constant 0 : i32
    return %c0_i32, %c0_i32_0 : i32, i32
  }
  func.func @transform_3(%arg0: i32) -> (i32, i32) {
    %c0_i32 = arith.constant 0 : i32
    %c0_i32_0 = arith.constant 0 : i32
    return %c0_i32, %arg0 : i32, i32
  }
}

</mosaic_0001>

<llo_original>
// kernel: tpu_custom_call.1
$region0: #{tpu_custom_call.1}
  #allocation0 [shape = 'u32[]', space=smem, size = 0x4, offset = 0x4, fixed_abs, tag = 'smem constant byte address 0x4 - core index']
  #allocation1 [shape = 'u32[144,128]{1,0:T(1,128)}', space=vmem, size = 0x12000, scoped, tag = 'internal scratch']
  %s0 = inlined_call_operand.vmem [shape: f32[32,256], index: 0, kind: input, shape index: {}]
  %s1 = inlined_call_operand.vmem [shape: bf16[256,160], index: 1, kind: input, shape index: {}]
  %s2 = inlined_call_operand.vmem [shape: f32[256,1], index: 2, kind: input, shape index: {}]
  %s3 = inlined_call_operand.hbm [shape: f32[64,256], index: 3, kind: output, shape index: {}]
  %s4 = sld [smem:[#allocation0]]
  $region22: #{tpu_custom_call.1} parent=0
    _
  %s6 = ssub.s32 1, %s4
  %s7 = scalar_select 0, %s6, %s4
  $region1: #{tpu_custom_call.1} parent=0
    #allocation2 [shape = 'u8[65536]{0}', space=vmem, size = 0x10000, scoped, tag = 'output window, operand 0, single buffered']
    #allocation3 [shape = 's32[1]{0}', space=sflag, size = 0x4, scoped, tag = 'scoped memory for tpu_custom_call.1']
    %8 = vsyncpa [#allocation3], 0
    // Predicated region
    $region2: #{tpu_custom_call.1} parent=1 // pred_check
      _
    $region3: #{tpu_custom_call.1} parent=1 // pred_check_branch
      %10 = sbr.rel (0) target = $region5
    $region4: #{tpu_custom_call.1} parent=1 // pred_region
      _
    $region5: #{tpu_custom_call.1} parent=1 // pred_fallthru
      _
    // Predicated region
    $region6: #{tpu_custom_call.1} parent=1 // pred_check
      _
    $region7: #{tpu_custom_call.1} parent=1 // pred_check_branch
      %12 = sbr.rel (0) target = $region9
    $region8: #{tpu_custom_call.1} parent=1 // pred_region
      _
    $region9: #{tpu_custom_call.1} parent=1 // pred_fallthru
      _
    // Predicated region
    $region10: #{tpu_custom_call.1} parent=1 // pred_check
      _
    $region11: #{tpu_custom_call.1} parent=1 // pred_check_branch
      %14 = sbr.rel (0) target = $region13
    $region12: #{tpu_custom_call.1} parent=1 // pred_region
      _
    $region13: #{tpu_custom_call.1} parent=1 // pred_fallthru
      _
    %v16 = vlaneseq
    %v17 = vand.u32 %v16, 127
    %v18 = vadd.s32 %v17, 128
    %vm19 = vcmp.lt.s32.totalorder %v17, 0
    %v20 = vsub.s32 0, %v17
    %v21 = vsel %vm19, %v20, %v17
    %v22 = vshrl.u32 %v21, 7
    %v23 = vand.u32 %v21, 127
    %v24 = vsub.s32 0, %v23
    %v25 = vsel %vm19, %v24, %v23
    %vm26 = vcmp.lt.s32.totalorder %v18, 0
    %v27 = vsub.s32 0, %v18
    %v28 = vsel %vm26, %v27, %v18
    %v29 = vshrl.u32 %v28, 7
    %v30 = vand.u32 %v28, 127
    %v31 = vsub.s32 0, %v30
    %v32 = vsel %vm26, %v31, %v30
    %vm33 = vcmp.ne.s32.totalorder %v25, 0
    %vm34 = vcmp.ne.s32.totalorder %v32, 0
    %vm35 = vcmp.lt.s32.totalorder %v25, 0
    %vm36 = vcmp.lt.s32.totalorder %v32, 0
    %vm37 = vmand %vm35, %vm33
    %vm38 = vmand %vm36, %vm34
    %v39 = vadd.s32 %v25, 128
    %v40 = vadd.s32 %v32, 128
    %v41 = vsel %vm37, %v39, %v25
    %v42 = vsel %vm38, %v40, %v32
    %v43 = vld [vmem:[%s0] sm:$0xff]
    %v44 = vld [vmem:[%s0 + $0x8] sm:$0xff]
    %v45 = vld [vmem:[%s0 + $0x10] sm:$0xff]
    %v46 = vld [vmem:[%s0 + $0x18] sm:$0xff]
    %v47 = vld [vmem:[%s0 + $0x20] sm:$0xff]
    %v48 = vld [vmem:[%s0 + $0x28] sm:$0xff]
    %v49 = vld [vmem:[%s0 + $0x30] sm:$0xff]
    %v50 = vld [vmem:[%s0 + $0x38] sm:$0xff]
    %v51 = vld [vmem:[%s1] sm:$0xf]
    %v52 = vld [vmem:[%s2] sm:$0xff]
    %53 = vrot.lane.b32.xlu0 %v43, 1
    %v54 = vpop.permute.xlu0 %53
    %55 = vrot.lane.b32.xlu0 %v45, 1
    %v56 = vpop.permute.xlu0 %55
    %57 = vrot.lane.b32.xlu0 %v47, 1
    %v58 = vpop.permute.xlu0 %57
    %59 = vrot.lane.b32.xlu0 %v49, 1
    %v60 = vpop.permute.xlu0 %59
    %61 = vrot.lane.b32.xlu0 %v44, 1
    %v62 = vpop.permute.xlu0 %61
    %63 = vrot.lane.b32.xlu0 %v46, 1
    %v64 = vpop.permute.xlu0 %63
    %65 = vrot.lane.b32.xlu0 %v48, 1
    %v66 = vpop.permute.xlu0 %65
    %67 = vrot.lane.b32.xlu0 %v50, 1
    %v68 = vpop.permute.xlu0 %67
    %vm69 = vcmp.lt.s32.totalorder %v17, 1
    %v70 = vsel %vm69, %v54, %v62
    %v71 = vsel %vm69, %v56, %v64
    %v72 = vsel %vm69, %v58, %v66
    %v73 = vsel %vm69, %v60, %v68
    %v74 = vsel %vm69, %v62, %v54
    %v75 = vsel %vm69, %v64, %v56
    %v76 = vsel %vm69, %v66, %v58
    %v77 = vsel %vm69, %v68, %v60
    %v78 = vadd.s32 %v41, 4294967295
    %v79 = vadd.s32 %v42, 4294967295
    %vm80 = vcmp.ge.s32.totalorder %v78, 0
    %vm81 = vcmp.ge.s32.totalorder %v79, 0
    %vm82 = vcmp.lt.s32.totalorder %v78, 128
    %vm83 = vcmp.lt.s32.totalorder %v79, 128
    %vm84 = vmand %vm80, %vm82
    %vm85 = vmand %vm81, %vm83
    %v86 = vsel %vm84, 1, 0
    %v87 = vsel %vm85, 1, 0
    %vm88 = vcmp.eq.s32.totalorder %v86, 1
    %vm89 = vcmp.eq.s32.totalorder %v87, 1
    %v90 = vsel %vm88, %v74, 0.0
    %v91 = vsel %vm89, %v70, 0.0
    %v92 = vsel %vm88, %v75, 0.0
    %v93 = vsel %vm89, %v71, 0.0
    %v94 = vsel %vm88, %v76, 0.0
    %v95 = vsel %vm89, %v72, 0.0
    %v96 = vsel %vm88, %v77, 0.0
    %v97 = vsel %vm89, %v73, 0.0
    %vm98 = vcmp.ge.s32.totalorder %v41, 0
    %vm99 = vcmp.ge.s32.totalorder %v42, 0
    %vm100 = vcmp.lt.s32.totalorder %v41, 128
    %vm101 = vcmp.lt.s32.totalorder %v42, 128
    %vm102 = vmand %vm98, %vm100
    %vm103 = vmand %vm99, %vm101
    %v104 = vsel %vm102, 1, 0
    %v105 = vsel %vm103, 1, 0
    %vm106 = vcmp.eq.s32.totalorder %v104, 1
    %vm107 = vcmp.eq.s32.totalorder %v105, 1
    %v108 = vsel %vm106, %v43, 0.0
    %v109 = vsel %vm107, %v44, 0.0
    %v110 = vsel %vm106, %v45, 0.0
    %v111 = vsel %vm107, %v46, 0.0
    %v112 = vsel %vm106, %v47, 0.0
    %v113 = vsel %vm107, %v48, 0.0
    %v114 = vsel %vm106, %v49, 0.0
    %v115 = vsel %vm107, %v50, 0.0
    %116 = vrot.lane.b32.xlu0 %v43, 127
    %v117 = vpop.permute.xlu0 %116
    %118 = vrot.lane.b32.xlu0 %v45, 127
    %v119 = vpop.permute.xlu0 %118
    %120 = vrot.lane.b32.xlu0 %v47, 127
    %v121 = vpop.permute.xlu0 %120
    %122 = vrot.lane.b32.xlu0 %v49, 127
    %v123 = vpop.permute.xlu0 %122
    %124 = vrot.lane.b32.xlu0 %v44, 127
    %v125 = vpop.permute.xlu0 %124
    %126 = vrot.lane.b32.xlu0 %v46, 127
    %v127 = vpop.permute.xlu0 %126
    %128 = vrot.lane.b32.xlu0 %v48, 127
    %v129 = vpop.permute.xlu0 %128
    %130 = vrot.lane.b32.xlu0 %v50, 127
    %v131 = vpop.permute.xlu0 %130
    %vm132 = vcmp.lt.s32.totalorder %v17, 127
    %v133 = vsel %vm132, %v117, %v125
    %v134 = vsel %vm132, %v119, %v127
    %v135 = vsel %vm132, %v121, %v129
    %v136 = vsel %vm132, %v123, %v131
    %v137 = vsel %vm132, %v125, %v117
    %v138 = vsel %vm132, %v127, %v119
    %v139 = vsel %vm132, %v129, %v121
    %v140 = vsel %vm132, %v131, %v123
    %v141 = vadd.s32 %v41, 1
    %v142 = vadd.s32 %v42, 1
    %vm143 = vcmp.ge.s32.totalorder %v141, 0
    %vm144 = vcmp.ge.s32.totalorder %v142, 0
    %vm145 = vcmp.lt.s32.totalorder %v141, 128
    %vm146 = vcmp.lt.s32.totalorder %v142, 128
    %vm147 = vmand %vm143, %vm145
    %vm148 = vmand %vm144, %vm146
    %v149 = vsel %vm147, 1, 0
    %v150 = vsel %vm148, 1, 0
    %vm151 = vcmp.eq.s32.totalorder %v149, 1
    %vm152 = vcmp.eq.s32.totalorder %v150, 1
    %v153 = vsel %vm151, %v133, 0.0
    %v154 = vsel %vm152, %v137, 0.0
    %v155 = vsel %vm151, %v134, 0.0
    %v156 = vsel %vm152, %v138, 0.0
    %v157 = vsel %vm151, %v135, 0.0
    %v158 = vsel %vm152, %v139, 0.0
    %v159 = vsel %vm151, %v136, 0.0
    %v160 = vsel %vm152, %v140, 0.0
    %v161 = vpack.c.bf16 %v92, %v90
    %v162 = vpack.c.bf16 %v93, %v91
    %v163 = vpack.c.bf16 %v96, %v94
    %v164 = vpack.c.bf16 %v97, %v95
    %v165 = vpack.c.bf16 %v110, %v108
    %v166 = vpack.c.bf16 %v111, %v109
    %v167 = vpack.c.bf16 %v114, %v112
    %v168 = vpack.c.bf16 %v115, %v113
    %v169 = vpack.c.bf16 %v155, %v153
    %v170 = vpack.c.bf16 %v156, %v154
    %v171 = vpack.c.bf16 %v159, %v157
    %v172 = vpack.c.bf16 %v160, %v158
    %174 = vset.pattern.permute.xlu0 0
    %175 = vperm.xlu0 %174, %v52
    %v176 = vpop.permute.xlu0 %175
    %vm178 = vcmask 785408
    %v180 = vsel %vm178, %v51, 0
    %182 = vmatprep.subr.bf16.mxu0 %v162
    %183 = vmatpush1.bf16.msra.mxu0 %v161
    %184 = vmatprep.subr.bf16.mxu0 %v164
    %185 = vmatpush1.bf16.msra.mxu0 %v163
    %186 = vmatprep.subr.bf16.mxu0 %v166
    %187 = vmatpush1.bf16.msra.mxu0 %v165
    %188 = vmatprep.subr.bf16.mxu0 %v168
    %189 = vmatpush1.bf16.msra.mxu0 %v167
    %190 = vmatprep.subr.bf16.mxu0 %v170
    %191 = vmatpush1.bf16.msra.mxu0 %v169
    %192 = vmatprep.subr.bf16.mxu0 %v172
    %193 = vmatpush1.bf16.msra.mxu0 %v171
    %194 = vmatprep.subr.bf16.mxu0 0
    %195 = vmatpush1.bf16.msra.mxu0 0
    %196 = vmatprep.subr.bf16.mxu0 0
    %197 = vmatpush1.bf16.msra.mxu0 0
    %198 = vmatprep.subr.bf16.mxu0 0
    %199 = vmatpush1.bf16.msra.mxu0 0
    %200 = vmatprep.subr.bf16.mxu0 0
    %201 = vmatpush1.bf16.msra.mxu0 0
    %202 = vmatprep.subr.bf16.mxu0 0
    %203 = vmatpush1.bf16.msra.mxu0 0
    %204 = vmatprep.subr.bf16.mxu0 0
    %205 = vmatpush1.bf16.msra.mxu0 0
    %206 = vmatprep.subr.bf16.mxu0 0
    %207 = vmatpush1.bf16.msra.mxu0 0
    %208 = vmatprep.subr.bf16.mxu0 0
    %209 = vmatpush1.bf16.msra.mxu0 0
    %210 = vmatprep.subr.bf16.mxu0 0
    %211 = vmatpush1.bf16.msra.mxu0 0
    %212 = vmatprep.subr.bf16.mxu0 0
    %213 = vmatpush1.bf16.msra.mxu0 0
    %214 = vmatprep.mubr.bf16.mxu0 0
    %215 = vmatmul.mubr.bf16.gmra.mrb[0].mxu0 %v180
    %v216 = vpop.f32.mrb[0].mxu0
    %v217 = vadd.f32 %v176, %v216
    %v218 = vpop.f32.mrb[0].mxu0
    %v219 = vadd.f32 %v176, %v218
    %v220 = vpop.f32.mrb[0].mxu0
    %v221 = vpop.f32.mrb[0].mxu0
    %222 = vdwg.mxu0
    %v223 = vld [vmem:[%s1 + $0x8] sm:$0xf]
    %v224 = vld [vmem:[%s2 + $0x8] sm:$0xff]
    %225 = vrot.lane.b32.xlu0 %v217, 1
    %v226 = vpop.permute.xlu0 %225
    %227 = vrot.lane.b32.xlu0 %v219, 1
    %v228 = vpop.permute.xlu0 %227
    %v229 = vsel %vm69, %v226, %v228
    %v230 = vsel %vm69, %v228, %v226
    %v231 = vsel %vm88, %v230, 0.0
    %v232 = vsel %vm89, %v229, 0.0
    %v233 = vsel %vm106, %v217, 0.0
    %v234 = vsel %vm107, %v219, 0.0
    %235 = vrot.lane.b32.xlu0 %v217, 127
    %v236 = vpop.permute.xlu0 %235
    %237 = vrot.lane.b32.xlu0 %v219, 127
    %v238 = vpop.permute.xlu0 %237
    %v239 = vsel %vm132, %v236, %v238
    %v240 = vsel %vm132, %v238, %v236
    %v241 = vsel %vm151, %v239, 0.0
    %v242 = vsel %vm152, %v240, 0.0
    %v243 = vpack.c.bf16 %v233, %v231
    %v244 = vpack.c.bf16 %v234, %v232
    %v245 = vpack.c.bf16 %v241, %v241
    %v246 = vpack.c.bf16 %v242, %v242
    %248 = vset.pattern.permute.xlu0 0
    %249 = vperm.xlu0 %248, %v224
    %v250 = vpop.permute.xlu0 %249
    %vm252 = vcmask 195584
    %v254 = vsel %vm252, %v223, 0
    %vm256 = vcmask 1043456
    %v258 = vsel %vm256, %v245, 0
    %v261 = vsel %vm256, %v246, 0
    %263 = vmatprep.subr.bf16.mxu0 %v244
    %264 = vmatpush1.bf16.msra.mxu0 %v243
    %265 = vmatprep.subr.bf16.mxu0 %v261
    %266 = vmatpush1.bf16.msra.mxu0 %v258
    %267 = vmatprep.subr.bf16.mxu0 0
    %268 = vmatpush1.bf16.msra.mxu0 0
    %269 = vmatprep.subr.bf16.mxu0 0
    %270 = vmatpush1.bf16.msra.mxu0 0
    %271 = vmatprep.subr.bf16.mxu0 0
    %272 = vmatpush1.bf16.msra.mxu0 0
    %273 = vmatprep.subr.bf16.mxu0 0
    %274 = vmatpush1.bf16.msra.mxu0 0
    %275 = vmatprep.subr.bf16.mxu0 0
    %276 = vmatpush1.bf16.msra.mxu0 0
    %277 = vmatprep.subr.bf16.mxu0 0
    %278 = vmatpush1.bf16.msra.mxu0 0
    %279 = vmatprep.subr.bf16.mxu0 0
    %280 = vmatpush1.bf16.msra.mxu0 0
    %281 = vmatprep.subr.bf16.mxu0 0
    %282 = vmatpush1.bf16.msra.mxu0 0
    %283 = vmatprep.subr.bf16.mxu0 0
    %284 = vmatpush1.bf16.msra.mxu0 0
    %285 = vmatprep.subr.bf16.mxu0 0
    %286 = vmatpush1.bf16.msra.mxu0 0
    %287 = vmatprep.subr.bf16.mxu0 0
    %288 = vmatpush1.bf16.msra.mxu0 0
    %289 = vmatprep.subr.bf16.mxu0 0
    %290 = vmatpush1.bf16.msra.mxu0 0
    %291 = vmatprep.subr.bf16.mxu0 0
    %292 = vmatpush1.bf16.msra.mxu0 0
    %293 = vmatprep.subr.bf16.mxu0 0
    %294 = vmatpush1.bf16.msra.mxu0 0
    %295 = vmatprep.mubr.bf16.mxu0 0
    %296 = vmatmul.mubr.bf16.gmra.mrb[0].mxu0 %v254
    %v297 = vpop.f32.mrb[0].mxu0
    %v298 = vadd.f32 %v250, %v297
    %v299 = vpop.f32.mrb[0].mxu0
    %v300 = vadd.f32 %v250, %v299
    %v301 = vpop.f32.mrb[0].mxu0
    %v302 = vpop.f32.mrb[0].mxu0
    %303 = vdwg.mxu0
    %v304 = vmul.f32 %v298, 0.5
    %v305 = vmul.f32 %v300, 0.5
    %v306 = vmul.f32 %v298, 0.70710677
    %v307 = vmul.f32 %v300, 0.70710677
    %v308 = verf.f32.pop %v306
    %v309 = verf.f32.pop %v307
    %v310 = vadd.f32 %v308, 1.0
    %v311 = vadd.f32 %v309, 1.0
    %v312 = vmul.f32 %v304, %v310
    %v313 = vmul.f32 %v305, %v311
    %v314 = vld [vmem:[%s1 + $0x10] sm:$0xff]
    %v315 = vld [vmem:[%s2 + $0x10] sm:$0xff]
    %316 = vrot.lane.b32.xlu0 %v43, 2
    %v317 = vpop.permute.xlu0 %316
    %318 = vrot.lane.b32.xlu0 %v45, 2
    %v319 = vpop.permute.xlu0 %318
    %320 = vrot.lane.b32.xlu0 %v47, 2
    %v321 = vpop.permute.xlu0 %320
    %322 = vrot.lane.b32.xlu0 %v49, 2
    %v323 = vpop.permute.xlu0 %322
    %324 = vrot.lane.b32.xlu0 %v44, 2
    %v325 = vpop.permute.xlu0 %324
    %326 = vrot.lane.b32.xlu0 %v46, 2
    %v327 = vpop.permute.xlu0 %326
    %328 = vrot.lane.b32.xlu0 %v48, 2
    %v329 = vpop.permute.xlu0 %328
    %330 = vrot.lane.b32.xlu0 %v50, 2
    %v331 = vpop.permute.xlu0 %330
    %vm332 = vcmp.lt.s32.totalorder %v17, 2
    %v333 = vsel %vm332, %v317, %v325
    %v334 = vsel %vm332, %v319, %v327
    %v335 = vsel %vm332, %v321, %v329
    %v336 = vsel %vm332, %v323, %v331
    %v337 = vsel %vm332, %v325, %v317
    %v338 = vsel %vm332, %v327, %v319
    %v339 = vsel %vm332, %v329, %v321
    %v340 = vsel %vm332, %v331, %v323
    %v341 = vadd.s32 %v41, 4294967294
    %v342 = vadd.s32 %v42, 4294967294
    %vm343 = vcmp.ge.s32.totalorder %v341, 0
    %vm344 = vcmp.ge.s32.totalorder %v342, 0
    %vm345 = vcmp.lt.s32.totalorder %v341, 128
    %vm346 = vcmp.lt.s32.totalorder %v342, 128
    %vm347 = vmand %vm343, %vm345
    %vm348 = vmand %vm344, %vm346
    %v349 = vsel %vm347, 1, 0
    %v350 = vsel %vm348, 1, 0
    %vm351 = vcmp.eq.s32.totalorder %v349, 1
    %vm352 = vcmp.eq.s32.totalorder %v350, 1
    %v353 = vsel %vm351, %v337, 0.0
    %v354 = vsel %vm352, %v333, 0.0
    %v355 = vsel %vm351, %v338, 0.0
    %v356 = vsel %vm352, %v334, 0.0
    %v357 = vsel %vm351, %v339, 0.0
    %v358 = vsel %vm352, %v335, 0.0
    %v359 = vsel %vm351, %v340, 0.0
    %v360 = vsel %vm352, %v336, 0.0
    %361 = vrot.lane.b32.xlu0 %v43, 126
    %v362 = vpop.permute.xlu0 %361
    %363 = vrot.lane.b32.xlu0 %v45, 126
    %v364 = vpop.permute.xlu0 %363
    %365 = vrot.lane.b32.xlu0 %v47, 126
    %v366 = vpop.permute.xlu0 %365
    %367 = vrot.lane.b32.xlu0 %v49, 126
    %v368 = vpop.permute.xlu0 %367
    %369 = vrot.lane.b32.xlu0 %v44, 126
    %v370 = vpop.permute.xlu0 %369
    %371 = vrot.lane.b32.xlu0 %v46, 126
    %v372 = vpop.permute.xlu0 %371
    %373 = vrot.lane.b32.xlu0 %v48, 126
    %v374 = vpop.permute.xlu0 %373
    %375 = vrot.lane.b32.xlu0 %v50, 126
    %v376 = vpop.permute.xlu0 %375
    %vm377 = vcmp.lt.s32.totalorder %v17, 126
    %v378 = vsel %vm377, %v362, %v370
    %v379 = vsel %vm377, %v364, %v372
    %v380 = vsel %vm377, %v366, %v374
    %v381 = vsel %vm377, %v368, %v376
    %v382 = vsel %vm377, %v370, %v362
    %v383 = vsel %vm377, %v372, %v364
    %v384 = vsel %vm377, %v374, %v366
    %v385 = vsel %vm377, %v376, %v368
    %v386 = vadd.s32 %v41, 2
    %v387 = vadd.s32 %v42, 2
    %vm388 = vcmp.ge.s32.totalorder %v386, 0
    %vm389 = vcmp.ge.s32.totalorder %v387, 0
    %vm390 = vcmp.lt.s32.totalorder %v386, 128
    %vm391 = vcmp.lt.s32.totalorder %v387, 128
    %vm392 = vmand %vm388, %vm390
    %vm393 = vmand %vm389, %vm391
    %v394 = vsel %vm392, 1, 0
    %v395 = vsel %vm393, 1, 0
    %vm396 = vcmp.eq.s32.totalorder %v394, 1
    %vm397 = vcmp.eq.s32.totalorder %v395, 1
    %v398 = vsel %vm396, %v378, 0.0
    %v399 = vsel %vm397, %v382, 0.0
    %v400 = vsel %vm396, %v379, 0.0
    %v401 = vsel %vm397, %v383, 0.0
    %v402 = vsel %vm396, %v380, 0.0
    %v403 = vsel %vm397, %v384, 0.0
    %v404 = vsel %vm396, %v381, 0.0
    %v405 = vsel %vm397, %v385, 0.0
    %v406 = vpack.c.bf16 %v355, %v353
    %v407 = vpack.c.bf16 %v356, %v354
    %v408 = vpack.c.bf16 %v359, %v357
    %v409 = vpack.c.bf16 %v360, %v358
    %v410 = vpack.c.bf16 %v400, %v398
    %v411 = vpack.c.bf16 %v401, %v399
    %v412 = vpack.c.bf16 %v404, %v402
    %v413 = vpack.c.bf16 %v405, %v403
    %415 = vset.pattern.permute.xlu0 0
    %416 = vperm.xlu0 %415, %v315
    %v417 = vpop.permute.xlu0 %416
    %v420 = vunpack.c.l.b16 %v314
    %v421 = vunpack.c.h.b16 %v314
    %v422 = vpack.c.b16 %v420, %v420
    %v423 = vpack.c.b16 %v421, %v421
    %vm425 = vcmask 261120
    %v427 = vsel %vm425, %v423, 0
    %429 = vmatprep.subr.bf16.mxu0 %v407
    %430 = vmatpush1.bf16.msra.mxu0 %v406
    %431 = vmatprep.subr.bf16.mxu0 %v409
    %432 = vmatpush1.bf16.msra.mxu0 %v408
    %433 = vmatprep.subr.bf16.mxu0 %v162
    %434 = vmatpush1.bf16.msra.mxu0 %v161
    %435 = vmatprep.subr.bf16.mxu0 %v164
    %436 = vmatpush1.bf16.msra.mxu0 %v163
    %437 = vmatprep.subr.bf16.mxu0 %v166
    %438 = vmatpush1.bf16.msra.mxu0 %v165
    %439 = vmatprep.subr.bf16.mxu0 %v168
    %440 = vmatpush1.bf16.msra.mxu0 %v167
    %441 = vmatprep.subr.bf16.mxu0 %v170
    %442 = vmatpush1.bf16.msra.mxu0 %v169
    %443 = vmatprep.subr.bf16.mxu0 %v172
    %444 = vmatpush1.bf16.msra.mxu0 %v171
    %445 = vmatprep.subr.bf16.mxu0 %v411
    %446 = vmatpush1.bf16.msra.mxu0 %v410
    %447 = vmatprep.subr.bf16.mxu0 %v413
    %448 = vmatpush1.bf16.msra.mxu0 %v412
    %449 = vmatprep.subr.bf16.mxu0 0
    %450 = vmatpush1.bf16.msra.mxu0 0
    %451 = vmatprep.subr.bf16.mxu0 0
    %452 = vmatpush1.bf16.msra.mxu0 0
    %453 = vmatprep.subr.bf16.mxu0 0
    %454 = vmatpush1.bf16.msra.mxu0 0
    %455 = vmatprep.subr.bf16.mxu0 0
    %456 = vmatpush1.bf16.msra.mxu0 0
    %457 = vmatprep.subr.bf16.mxu0 0
    %458 = vmatpush1.bf16.msra.mxu0 0
    %459 = vmatprep.subr.bf16.mxu0 0
    %460 = vmatpush1.bf16.msra.mxu0 0
    %461 = vmatprep.mubr.bf16.mxu0 %v427
    %462 = vmatmul.mubr.bf16.gmra.mrb[0].mxu0 %v422
    %v463 = vpop.f32.mrb[0].mxu0
    %v464 = vadd.f32 %v417, %v463
    %v465 = vpop.f32.mrb[0].mxu0
    %v466 = vadd.f32 %v417, %v465
    %v467 = vpop.f32.mrb[0].mxu0
    %v468 = vpop.f32.mrb[0].mxu0
    %469 = vdwg.mxu0
    %v470 = vld [vmem:[%s1 + $0x18] sm:$0xf]
    %v471 = vld [vmem:[%s2 + $0x18] sm:$0xff]
    %472 = vrot.lane.b32.xlu0 %v464, 2
    %v473 = vpop.permute.xlu0 %472
    %474 = vrot.lane.b32.xlu0 %v466, 2
    %v475 = vpop.permute.xlu0 %474
    %v476 = vsel %vm332, %v473, %v475
    %v477 = vsel %vm332, %v475, %v473
    %v478 = vsel %vm351, %v477, 0.0
    %v479 = vsel %vm352, %v476, 0.0
    %480 = vrot.lane.b32.xlu0 %v464, 1
    %v481 = vpop.permute.xlu0 %480
    %482 = vrot.lane.b32.xlu0 %v466, 1
    %v483 = vpop.permute.xlu0 %482
    %v484 = vsel %vm69, %v481, %v483
    %v485 = vsel %vm69, %v483, %v481
    %v486 = vsel %vm88, %v485, 0.0
    %v487 = vsel %vm89, %v484, 0.0
    %v488 = vsel %vm106, %v464, 0.0
    %v489 = vsel %vm107, %v466, 0.0
    %490 = vrot.lane.b32.xlu0 %v464, 127
    %v491 = vpop.permute.xlu0 %490
    %492 = vrot.lane.b32.xlu0 %v466, 127
    %v493 = vpop.permute.xlu0 %492
    %v494 = vsel %vm132, %v491, %v493
    %v495 = vsel %vm132, %v493, %v491
    %v496 = vsel %vm151, %v494, 0.0
    %v497 = vsel %vm152, %v495, 0.0
    %498 = vrot.lane.b32.xlu0 %v464, 126
    %v499 = vpop.permute.xlu0 %498
    %500 = vrot.lane.b32.xlu0 %v466, 126
    %v501 = vpop.permute.xlu0 %500
    %v502 = vsel %vm377, %v499, %v501
    %v503 = vsel %vm377, %v501, %v499
    %v504 = vsel %vm396, %v502, 0.0
    %v505 = vsel %vm397, %v503, 0.0
    %v506 = vpack.c.bf16 %v486, %v478
    %v507 = vpack.c.bf16 %v487, %v479
    %v508 = vpack.c.bf16 %v496, %v488
    %v509 = vpack.c.bf16 %v497, %v489
    %v510 = vpack.c.bf16 %v504, %v504
    %v511 = vpack.c.bf16 %v505, %v505
    %513 = vset.pattern.permute.xlu0 0
    %514 = vperm.xlu0 %513, %v471
    %v515 = vpop.permute.xlu0 %514
    %vm517 = vcmask 326656
    %v519 = vsel %vm517, %v470, 0
    %v522 = vsel %vm256, %v510, 0
    %v525 = vsel %vm256, %v511, 0
    %527 = vmatprep.subr.bf16.mxu0 %v507
    %528 = vmatpush1.bf16.msra.mxu0 %v506
    %529 = vmatprep.subr.bf16.mxu0 %v509
    %530 = vmatpush1.bf16.msra.mxu0 %v508
    %531 = vmatprep.subr.bf16.mxu0 %v525
    %532 = vmatpush1.bf16.msra.mxu0 %v522
    %533 = vmatprep.subr.bf16.mxu0 0
    %534 = vmatpush1.bf16.msra.mxu0 0
    %535 = vmatprep.subr.bf16.mxu0 0
    %536 = vmatpush1.bf16.msra.mxu0 0
    %537 = vmatprep.subr.bf16.mxu0 0
    %538 = vmatpush1.bf16.msra.mxu0 0
    %539 = vmatprep.subr.bf16.mxu0 0
    %540 = vmatpush1.bf16.msra.mxu0 0
    %541 = vmatprep.subr.bf16.mxu0 0
    %542 = vmatpush1.bf16.msra.mxu0 0
    %543 = vmatprep.subr.bf16.mxu0 0
    %544 = vmatpush1.bf16.msra.mxu0 0
    %545 = vmatprep.subr.bf16.mxu0 0
    %546 = vmatpush1.bf16.msra.mxu0 0
    %547 = vmatprep.subr.bf16.mxu0 0
    %548 = vmatpush1.bf16.msra.mxu0 0
    %549 = vmatprep.subr.bf16.mxu0 0
    %550 = vmatpush1.bf16.msra.mxu0 0
    %551 = vmatprep.subr.bf16.mxu0 0
    %552 = vmatpush1.bf16.msra.mxu0 0
    %553 = vmatprep.subr.bf16.mxu0 0
    %554 = vmatpush1.bf16.msra.mxu0 0
    %555 = vmatprep.subr.bf16.mxu0 0
    %556 = vmatpush1.bf16.msra.mxu0 0
    %557 = vmatprep.subr.bf16.mxu0 0
    %558 = vmatpush1.bf16.msra.mxu0 0
    %559 = vmatprep.mubr.bf16.mxu0 0
    %560 = vmatmul.mubr.bf16.gmra.mrb[0].mxu0 %v519
    %v561 = vpop.f32.mrb[0].mxu0
    %v562 = vadd.f32 %v515, %v561
    %v563 = vpop.f32.mrb[0].mxu0
    %v564 = vadd.f32 %v515, %v563
    %v565 = vpop.f32.mrb[0].mxu0
    %v566 = vpop.f32.mrb[0].mxu0
    %567 = vdwg.mxu0
    %v568 = vmul.f32 %v562, 0.5
    %v569 = vmul.f32 %v564, 0.5
    %v570 = vmul.f32 %v562, 0.70710677
    %v571 = vmul.f32 %v564, 0.70710677
    %v572 = verf.f32.pop %v570
    %v573 = verf.f32.pop %v571
    %v574 = vadd.f32 %v572, 1.0
    %v575 = vadd.f32 %v573, 1.0
    %v576 = vmul.f32 %v568, %v574
    %v577 = vmul.f32 %v569, %v575
    %vm578 = vcmp.ge.s32.totalorder %v41, 1
    %vm579 = vcmp.ge.s32.totalorder %v42, 1
    %v580 = vsel %vm578, 1, 0
    %v581 = vsel %vm579, 1, 0
    %vm582 = vcmp.eq.s32.totalorder %v580, 1
    %vm583 = vcmp.eq.s32.totalorder %v581, 1
    %v584 = vsel %vm582, %v74, %v43
    %v585 = vsel %vm583, %v70, %v44
    %v586 = vsel %vm582, %v75, %v45
    %v587 = vsel %vm583, %v71, %v46
    %v588 = vsel %vm582, %v76, %v47
    %v589 = vsel %vm583, %v72, %v48
    %v590 = vsel %vm582, %v77, %v49
    %v591 = vsel %vm583, %v73, %v50
    %vm592 = vcmp.le.s32.totalorder %v41, 126
    %vm593 = vcmp.le.s32.totalorder %v42, 126
    %v594 = vsel %vm592, 1, 0
    %v595 = vsel %vm593, 1, 0
    %vm596 = vcmp.eq.s32.totalorder %v594, 1
    %vm597 = vcmp.eq.s32.totalorder %v595, 1
    %v598 = vsel %vm596, %v133, %v43
    %v599 = vsel %vm597, %v137, %v44
    %v600 = vsel %vm596, %v134, %v45
    %v601 = vsel %vm597, %v138, %v46
    %v602 = vsel %vm596, %v135, %v47
    %v603 = vsel %vm597, %v139, %v48
    %v604 = vsel %vm596, %v136, %v49
    %v605 = vsel %vm597, %v140, %v50
    %v606 = vmax.f32 %v43, %v584
    %v607 = vmax.f32 %v44, %v585
    %v608 = vmax.f32 %v45, %v586
    %v609 = vmax.f32 %v46, %v587
    %v610 = vmax.f32 %v47, %v588
    %v611 = vmax.f32 %v48, %v589
    %v612 = vmax.f32 %v49, %v590
    %v613 = vmax.f32 %v50, %v591
    %v614 = vmax.f32 %v606, %v598
    %v615 = vmax.f32 %v607, %v599
    %v616 = vmax.f32 %v608, %v600
    %v617 = vmax.f32 %v609, %v601
    %v618 = vmax.f32 %v610, %v602
    %v619 = vmax.f32 %v611, %v603
    %v620 = vmax.f32 %v612, %v604
    %v621 = vmax.f32 %v613, %v605
    %v622 = vmul.f32 %v614, 0.5
    %v623 = vmul.f32 %v615, 0.5
    %v624 = vmul.f32 %v616, 0.5
    %v625 = vmul.f32 %v617, 0.5
    %v626 = vmul.f32 %v618, 0.5
    %v627 = vmul.f32 %v619, 0.5
    %v628 = vmul.f32 %v620, 0.5
    %v629 = vmul.f32 %v621, 0.5
    %v630 = vmul.f32 %v614, 0.70710677
    %v631 = vmul.f32 %v615, 0.70710677
    %v632 = vmul.f32 %v616, 0.70710677
    %v633 = vmul.f32 %v617, 0.70710677
    %v634 = vmul.f32 %v618, 0.70710677
    %v635 = vmul.f32 %v619, 0.70710677
    %v636 = vmul.f32 %v620, 0.70710677
    %v637 = vmul.f32 %v621, 0.70710677
    %v638 = verf.f32.pop %v630
    %v639 = verf.f32.pop %v631
    %v640 = verf.f32.pop %v632
    %v641 = verf.f32.pop %v633
    %v642 = verf.f32.pop %v634
    %v643 = verf.f32.pop %v635
    %v644 = verf.f32.pop %v636
    %v645 = verf.f32.pop %v637
    %v646 = vadd.f32 %v638, 1.0
    %v647 = vadd.f32 %v639, 1.0
    %v648 = vadd.f32 %v640, 1.0
    %v649 = vadd.f32 %v641, 1.0
    %v650 = vadd.f32 %v642, 1.0
    %v651 = vadd.f32 %v643, 1.0
    %v652 = vadd.f32 %v644, 1.0
    %v653 = vadd.f32 %v645, 1.0
    %v654 = vmul.f32 %v622, %v646
    %v655 = vmul.f32 %v623, %v647
    %v656 = vmul.f32 %v624, %v648
    %v657 = vmul.f32 %v625, %v649
    %v658 = vmul.f32 %v626, %v650
    %v659 = vmul.f32 %v627, %v651
    %v660 = vmul.f32 %v628, %v652
    %v661 = vmul.f32 %v629, %v653
    %v662 = vld [vmem:[%s1 + $0x20] sm:$0xf]
    %v663 = vld [vmem:[%s2 + $0x20] sm:$0xff]
    %v664 = vpack.c.bf16 %v656, %v654
    %v665 = vpack.c.bf16 %v657, %v655
    %v666 = vpack.c.bf16 %v660, %v658
    %v667 = vpack.c.bf16 %v661, %v659
    %669 = vset.pattern.permute.xlu0 0
    %670 = vperm.xlu0 %669, %v663
    %v671 = vpop.permute.xlu0 %670
    %v674 = vsel %vm425, %v662, 0
    %676 = vmatprep.subr.bf16.mxu0 %v665
    %677 = vmatpush1.bf16.msra.mxu0 %v664
    %678 = vmatprep.subr.bf16.mxu0 %v667
    %679 = vmatpush1.bf16.msra.mxu0 %v666
    %680 = vmatprep.subr.bf16.mxu0 0
    %681 = vmatpush1.bf16.msra.mxu0 0
    %682 = vmatprep.subr.bf16.mxu0 0
    %683 = vmatpush1.bf16.msra.mxu0 0
    %684 = vmatprep.subr.bf16.mxu0 0
    %685 = vmatpush1.bf16.msra.mxu0 0
    %686 = vmatprep.subr.bf16.mxu0 0
    %687 = vmatpush1.bf16.msra.mxu0 0
    %688 = vmatprep.subr.bf16.mxu0 0
    %689 = vmatpush1.bf16.msra.mxu0 0
    %690 = vmatprep.subr.bf16.mxu0 0
    %691 = vmatpush1.bf16.msra.mxu0 0
    %692 = vmatprep.subr.bf16.mxu0 0
    %693 = vmatpush1.bf16.msra.mxu0 0
    %694 = vmatprep.subr.bf16.mxu0 0
    %695 = vmatpush1.bf16.msra.mxu0 0
    %696 = vmatprep.subr.bf16.mxu0 0
    %697 = vmatpush1.bf16.msra.mxu0 0
    %698 = vmatprep.subr.bf16.mxu0 0
    %699 = vmatpush1.bf16.msra.mxu0 0
    %700 = vmatprep.subr.bf16.mxu0 0
    %701 = vmatpush1.bf16.msra.mxu0 0
    %702 = vmatprep.subr.bf16.mxu0 0
    %703 = vmatpush1.bf16.msra.mxu0 0
    %704 = vmatprep.subr.bf16.mxu0 0
    %705 = vmatpush1.bf16.msra.mxu0 0
    %706 = vmatprep.subr.bf16.mxu0 0
    %707 = vmatpush1.bf16.msra.mxu0 0
    %708 = vmatprep.mubr.bf16.mxu0 0
    %709 = vmatmul.mubr.bf16.gmra.mrb[0].mxu0 %v674
    %v710 = vpop.f32.mrb[0].mxu0
    %v711 = vadd.f32 %v671, %v710
    %v712 = vpop.f32.mrb[0].mxu0
    %v713 = vadd.f32 %v671, %v712
    %v714 = vpop.f32.mrb[0].mxu0
    %v715 = vpop.f32.mrb[0].mxu0
    %716 = vdwg.mxu0
    %v717 = vld [vmem:[%s1 + $0x28] sm:$0xf]
    %v718 = vld [vmem:[%s1 + $0x30] sm:$0xf]
    %v719 = vld [vmem:[%s1 + $0x38] sm:$0xf]
    %v720 = vld [vmem:[%s1 + $0x40] sm:$0xf]
    %v721 = vld [vmem:[%s2 + $0x28] sm:$0xff]
    %v722 = vld [vmem:[%s2 + $0x30] sm:$0xff]
    %v723 = vld [vmem:[%s2 + $0x38] sm:$0xff]
    %v724 = vld [vmem:[%s2 + $0x40] sm:$0xff]
    %725 = vrot.lane.b32.xlu0 %v312, 1
    %v726 = vpop.permute.xlu0 %725
    %727 = vrot.lane.b32.xlu0 %v576, 1
    %v728 = vpop.permute.xlu0 %727
    %729 = vrot.lane.b32.xlu0 %v711, 1
    %v730 = vpop.permute.xlu0 %729
    %731 = vrot.lane.b32.xlu0 %v313, 1
    %v732 = vpop.permute.xlu0 %731
    %733 = vrot.lane.b32.xlu0 %v577, 1
    %v734 = vpop.permute.xlu0 %733
    %735 = vrot.lane.b32.xlu0 %v713, 1
    %v736 = vpop.permute.xlu0 %735
    %v737 = vsel %vm69, %v726, %v732
    %v738 = vsel %vm69, %v728, %v734
    %v739 = vsel %vm69, %v730, %v736
    %v740 = vsel %vm69, %v732, %v726
    %v741 = vsel %vm69, %v734, %v728
    %v742 = vsel %vm69, %v736, %v730
    %v743 = vsel %vm88, %v740, 0.0
    %v744 = vsel %vm89, %v737, 0.0
    %v745 = vsel %vm88, %v741, 0.0
    %v746 = vsel %vm89, %v738, 0.0
    %v747 = vsel %vm88, %v742, 0.0
    %v748 = vsel %vm89, %v739, 0.0
    %v749 = vsel %vm106, %v312, 0.0
    %v750 = vsel %vm107, %v313, 0.0
    %v751 = vsel %vm106, %v576, 0.0
    %v752 = vsel %vm107, %v577, 0.0
    %v753 = vsel %vm106, %v711, 0.0
    %v754 = vsel %vm107, %v713, 0.0
    %755 = vrot.lane.b32.xlu0 %v312, 127
    %v756 = vpop.permute.xlu0 %755
    %757 = vrot.lane.b32.xlu0 %v576, 127
    %v758 = vpop.permute.xlu0 %757
    %759 = vrot.lane.b32.xlu0 %v711, 127
    %v760 = vpop.permute.xlu0 %759
    %761 = vrot.lane.b32.xlu0 %v313, 127
    %v762 = vpop.permute.xlu0 %761
    %763 = vrot.lane.b32.xlu0 %v577, 127
    %v764 = vpop.permute.xlu0 %763
    %765 = vrot.lane.b32.xlu0 %v713, 127
    %v766 = vpop.permute.xlu0 %765
    %v767 = vsel %vm132, %v756, %v762
    %v768 = vsel %vm132, %v758, %v764
    %v769 = vsel %vm132, %v760, %v766
    %v770 = vsel %vm132, %v762, %v756
    %v771 = vsel %vm132, %v764, %v758
    %v772 = vsel %vm132, %v766, %v760
    %v773 = vsel %vm151, %v767, 0.0
    %v774 = vsel %vm152, %v770, 0.0
    %v775 = vsel %vm151, %v768, 0.0
    %v776 = vsel %vm152, %v771, 0.0
    %v777 = vsel %vm151, %v769, 0.0
    %v778 = vsel %vm152, %v772, 0.0
    %v779 = vpack.c.bf16 %v745, %v743
    %v780 = vpack.c.bf16 %v746, %v744
    %v781 = vpack.c.bf16 %v749, %v747
    %v782 = vpack.c.bf16 %v750, %v748
    %v783 = vpack.c.bf16 %v753, %v751
    %v784 = vpack.c.bf16 %v754, %v752
    %v785 = vpack.c.bf16 %v775, %v773
    %v786 = vpack.c.bf16 %v776, %v774
    %v787 = vpack.c.bf16 %v777, %v777
    %v788 = vpack.c.bf16 %v778, %v778
    %790 = vset.pattern.permute.xlu0 0
    %791 = vperm.xlu0 %790, %v721
    %v792 = vpop.permute.xlu0 %791
    %795 = vset.pattern.permute.xlu0 0
    %796 = vperm.xlu0 %795, %v722
    %v797 = vpop.permute.xlu0 %796
    %800 = vset.pattern.permute.xlu0 0
    %801 = vperm.xlu0 %800, %v723
    %v802 = vpop.permute.xlu0 %801
    %805 = vset.pattern.permute.xlu0 0
    %806 = vperm.xlu0 %805, %v724
    %v807 = vpop.permute.xlu0 %806
    %v813 = vunpack.c.l.b16 %v717
    %v814 = vunpack.c.l.b16 %v718
    %v815 = vunpack.c.l.b16 %v719
    %v816 = vunpack.c.l.b16 %v720
    %v817 = vpack.c.b16 %v814, %v813
    %v818 = vpack.c.b16 %v816, %v815
    %vm819 = vcmask 588800
    %v821 = vsel %vm819, %v817, 0
    %v824 = vsel %vm819, %v818, 0
    %v827 = vsel %vm256, %v787, 0
    %v830 = vsel %vm256, %v788, 0
    %832 = vmatprep.subr.bf16.mxu0 %v780
    %833 = vmatpush1.bf16.msra.mxu0 %v779
    %834 = vmatprep.subr.bf16.mxu0 %v782
    %835 = vmatpush1.bf16.msra.mxu0 %v781
    %836 = vmatprep.subr.bf16.mxu0 %v784
    %837 = vmatpush1.bf16.msra.mxu0 %v783
    %838 = vmatprep.subr.bf16.mxu0 %v786
    %839 = vmatpush1.bf16.msra.mxu0 %v785
    %840 = vmatprep.subr.bf16.mxu0 %v830
    %841 = vmatpush1.bf16.msra.mxu0 %v827
    %842 = vmatprep.subr.bf16.mxu0 0
    %843 = vmatpush1.bf16.msra.mxu0 0
    %844 = vmatprep.subr.bf16.mxu0 0
    %845 = vmatpush1.bf16.msra.mxu0 0
    %846 = vmatprep.subr.bf16.mxu0 0
    %847 = vmatpush1.bf16.msra.mxu0 0
    %848 = vmatprep.subr.bf16.mxu0 0
    %849 = vmatpush1.bf16.msra.mxu0 0
    %850 = vmatprep.subr.bf16.mxu0 0
    %851 = vmatpush1.bf16.msra.mxu0 0
    %852 = vmatprep.subr.bf16.mxu0 0
    %853 = vmatpush1.bf16.msra.mxu0 0
    %854 = vmatprep.subr.bf16.mxu0 0
    %855 = vmatpush1.bf16.msra.mxu0 0
    %856 = vmatprep.subr.bf16.mxu0 0
    %857 = vmatpush1.bf16.msra.mxu0 0
    %858 = vmatprep.subr.bf16.mxu0 0
    %859 = vmatpush1.bf16.msra.mxu0 0
    %860 = vmatprep.subr.bf16.mxu0 0
    %861 = vmatpush1.bf16.msra.mxu0 0
    %862 = vmatprep.subr.bf16.mxu0 0
    %863 = vmatpush1.bf16.msra.mxu0 0
    %864 = vmatprep.mubr.bf16.mxu0 0
    %865 = vmatmul.mubr.bf16.gmra.mrb[0].mxu0 %v821
    %v866 = vpop.f32.mrb[0].mxu0
    %v867 = vadd.f32 %v792, %v866
    %v868 = vpop.f32.mrb[0].mxu0
    %v869 = vadd.f32 %v792, %v868
    %v870 = vpop.f32.mrb[0].mxu0
    %v871 = vadd.f32 %v797, %v870
    %v872 = vpop.f32.mrb[0].mxu0
    %v873 = vadd.f32 %v797, %v872
    %874 = vmatprep.mubr.bf16.mxu0 0
    %875 = vmatmul.mubr.bf16.gmra.mrb[0].mxu0 %v824
    %v876 = vpop.f32.mrb[0].mxu0
    %v877 = vadd.f32 %v802, %v876
    %v878 = vpop.f32.mrb[0].mxu0
    %v879 = vadd.f32 %v802, %v878
    %v880 = vpop.f32.mrb[0].mxu0
    %v881 = vadd.f32 %v807, %v880
    %v882 = vpop.f32.mrb[0].mxu0
    %v883 = vadd.f32 %v807, %v882
    %884 = vdwg.mxu0
    %v885 = vadd.f32 %v867, %v43
    %v886 = vadd.f32 %v869, %v44
    %v887 = vadd.f32 %v871, %v45
    %v888 = vadd.f32 %v873, %v46
    %v889 = vadd.f32 %v877, %v47
    %v890 = vadd.f32 %v879, %v48
    %v891 = vadd.f32 %v881, %v49
    %v892 = vadd.f32 %v883, %v50
    %v893 = vld [vmem:[%s1 + $0x48] sm:$0xf]
    %v894 = vld [vmem:[%s2 + $0x48] sm:$0xff]
    %895 = vrot.lane.b32.xlu0 %v885, 5
    %v896 = vpop.permute.xlu0 %895
    %897 = vrot.lane.b32.xlu0 %v887, 5
    %v898 = vpop.permute.xlu0 %897
    %899 = vrot.lane.b32.xlu0 %v889, 5
    %v900 = vpop.permute.xlu0 %899
    %901 = vrot.lane.b32.xlu0 %v891, 5
    %v902 = vpop.permute.xlu0 %901
    %903 = vrot.lane.b32.xlu0 %v886, 5
    %v904 = vpop.permute.xlu0 %903
    %905 = vrot.lane.b32.xlu0 %v888, 5
    %v906 = vpop.permute.xlu0 %905
    %907 = vrot.lane.b32.xlu0 %v890, 5
    %v908 = vpop.permute.xlu0 %907
    %909 = vrot.lane.b32.xlu0 %v892, 5
    %v910 = vpop.permute.xlu0 %909
    %vm911 = vcmp.lt.s32.totalorder %v17, 5
    %v912 = vsel %vm911, %v896, %v904
    %v913 = vsel %vm911, %v898, %v906
    %v914 = vsel %vm911, %v900, %v908
    %v915 = vsel %vm911, %v902, %v910
    %v916 = vsel %vm911, %v904, %v896
    %v917 = vsel %vm911, %v906, %v898
    %v918 = vsel %vm911, %v908, %v900
    %v919 = vsel %vm911, %v910, %v902
    %v920 = vadd.s32 %v41, 4294967291
    %v921 = vadd.s32 %v42, 4294967291
    %vm922 = vcmp.ge.s32.totalorder %v920, 0
    %vm923 = vcmp.ge.s32.totalorder %v921, 0
    %vm924 = vcmp.lt.s32.totalorder %v920, 128
    %vm925 = vcmp.lt.s32.totalorder %v921, 128
    %vm926 = vmand %vm922, %vm924
    %vm927 = vmand %vm923, %vm925
    %v928 = vsel %vm926, 1, 0
    %v929 = vsel %vm927, 1, 0
    %vm930 = vcmp.eq.s32.totalorder %v928, 1
    %vm931 = vcmp.eq.s32.totalorder %v929, 1
    %v932 = vsel %vm930, %v916, 0.0
    %v933 = vsel %vm931, %v912, 0.0
    %v934 = vsel %vm930, %v917, 0.0
    %v935 = vsel %vm931, %v913, 0.0
    %v936 = vsel %vm930, %v918, 0.0
    %v937 = vsel %vm931, %v914, 0.0
    %v938 = vsel %vm930, %v919, 0.0
    %v939 = vsel %vm931, %v915, 0.0
    %v940 = vsel %vm106, %v885, 0.0
    %v941 = vsel %vm107, %v886, 0.0
    %v942 = vsel %vm106, %v887, 0.0
    %v943 = vsel %vm107, %v888, 0.0
    %v944 = vsel %vm106, %v889, 0.0
    %v945 = vsel %vm107, %v890, 0.0
    %v946 = vsel %vm106, %v891, 0.0
    %v947 = vsel %vm107, %v892, 0.0
    %948 = vrot.lane.b32.xlu0 %v885, 123
    %v949 = vpop.permute.xlu0 %948
    %950 = vrot.lane.b32.xlu0 %v887, 123
    %v951 = vpop.permute.xlu0 %950
    %952 = vrot.lane.b32.xlu0 %v889, 123
    %v953 = vpop.permute.xlu0 %952
    %954 = vrot.lane.b32.xlu0 %v891, 123
    %v955 = vpop.permute.xlu0 %954
    %956 = vrot.lane.b32.xlu0 %v886, 123
    %v957 = vpop.permute.xlu0 %956
    %958 = vrot.lane.b32.xlu0 %v888, 123
    %v959 = vpop.permute.xlu0 %958
    %960 = vrot.lane.b32.xlu0 %v890, 123
    %v961 = vpop.permute.xlu0 %960
    %962 = vrot.lane.b32.xlu0 %v892, 123
    %v963 = vpop.permute.xlu0 %962
    %vm964 = vcmp.lt.s32.totalorder %v17, 123
    %v965 = vsel %vm964, %v949, %v957
    %v966 = vsel %vm964, %v951, %v959
    %v967 = vsel %vm964, %v953, %v961
    %v968 = vsel %vm964, %v955, %v963
    %v969 = vsel %vm964, %v957, %v949
    %v970 = vsel %vm964, %v959, %v951
    %v971 = vsel %vm964, %v961, %v953
    %v972 = vsel %vm964, %v963, %v955
    %v973 = vadd.s32 %v41, 5
    %v974 = vadd.s32 %v42, 5
    %vm975 = vcmp.ge.s32.totalorder %v973, 0
    %vm976 = vcmp.ge.s32.totalorder %v974, 0
    %vm977 = vcmp.lt.s32.totalorder %v973, 128
    %vm978 = vcmp.lt.s32.totalorder %v974, 128
    %vm979 = vmand %vm975, %vm977
    %vm980 = vmand %vm976, %vm978
    %v981 = vsel %vm979, 1, 0
    %v982 = vsel %vm980, 1, 0
    %vm983 = vcmp.eq.s32.totalorder %v981, 1
    %vm984 = vcmp.eq.s32.totalorder %v982, 1
    %v985 = vsel %vm983, %v965, 0.0
    %v986 = vsel %vm984, %v969, 0.0
    %v987 = vsel %vm983, %v966, 0.0
    %v988 = vsel %vm984, %v970, 0.0
    %v989 = vsel %vm983, %v967, 0.0
    %v990 = vsel %vm984, %v971, 0.0
    %v991 = vsel %vm983, %v968, 0.0
    %v992 = vsel %vm984, %v972, 0.0
    %v993 = vpack.c.bf16 %v934, %v932
    %v994 = vpack.c.bf16 %v935, %v933
    %v995 = vpack.c.bf16 %v938, %v936
    %v996 = vpack.c.bf16 %v939, %v937
    %v997 = vpack.c.bf16 %v942, %v940
    %v998 = vpack.c.bf16 %v943, %v941
    %v999 = vpack.c.bf16 %v946, %v944
    %v1000 = vpack.c.bf16 %v947, %v945
    %v1001 = vpack.c.bf16 %v987, %v985
    %v1002 = vpack.c.bf16 %v988, %v986
    %v1003 = vpack.c.bf16 %v991, %v989
    %v1004 = vpack.c.bf16 %v992, %v990
    %1006 = vset.pattern.permute.xlu0 0
    %1007 = vperm.xlu0 %1006, %v894
    %v1008 = vpop.permute.xlu0 %1007
    %v1011 = vsel %vm178, %v893, 0
    %1013 = vmatprep.subr.bf16.mxu0 %v994
    %1014 = vmatpush1.bf16.msra.mxu0 %v993
    %1015 = vmatprep.subr.bf16.mxu0 %v996
    %1016 = vmatpush1.bf16.msra.mxu0 %v995
    %1017 = vmatprep.subr.bf16.mxu0 %v998
    %1018 = vmatpush1.bf16.msra.mxu0 %v997
    %1019 = vmatprep.subr.bf16.mxu0 %v1000
    %1020 = vmatpush1.bf16.msra.mxu0 %v999
    %1021 = vmatprep.subr.bf16.mxu0 %v1002
    %1022 = vmatpush1.bf16.msra.mxu0 %v1001
    %1023 = vmatprep.subr.bf16.mxu0 %v1004
    %1024 = vmatpush1.bf16.msra.mxu0 %v1003
    %1025 = vmatprep.subr.bf16.mxu0 0
    %1026 = vmatpush1.bf16.msra.mxu0 0
    %1027 = vmatprep.subr.bf16.mxu0 0
    %1028 = vmatpush1.bf16.msra.mxu0 0
    %1029 = vmatprep.subr.bf16.mxu0 0
    %1030 = vmatpush1.bf16.msra.mxu0 0
    %1031 = vmatprep.subr.bf16.mxu0 0
    %1032 = vmatpush1.bf16.msra.mxu0 0
    %1033 = vmatprep.subr.bf16.mxu0 0
    %1034 = vmatpush1.bf16.msra.mxu0 0
    %1035 = vmatprep.subr.bf16.mxu0 0
    %1036 = vmatpush1.bf16.msra.mxu0 0
    %1037 = vmatprep.subr.bf16.mxu0 0
    %1038 = vmatpush1.bf16.msra.mxu0 0
    %1039 = vmatprep.subr.bf16.mxu0 0
    %1040 = vmatpush1.bf16.msra.mxu0 0
    %1041 = vmatprep.subr.bf16.mxu0 0
    %1042 = vmatpush1.bf16.msra.mxu0 0
    %1043 = vmatprep.subr.bf16.mxu0 0
    %1044 = vmatpush1.bf16.msra.mxu0 0
    %1045 = vmatprep.mubr.bf16.mxu0 0
    %1046 = vmatmul.mubr.bf16.gmra.mrb[0].mxu0 %v1011
    %v1047 = vpop.f32.mrb[0].mxu0
    %v1048 = vadd.f32 %v1008, %v1047
    %v1049 = vpop.f32.mrb[0].mxu0
    %v1050 = vadd.f32 %v1008, %v1049
    %v1051 = vpop.f32.mrb[0].mxu0
    %v1052 = vpop.f32.mrb[0].mxu0
    %1053 = vdwg.mxu0
    %v1054 = vld [vmem:[%s1 + $0x50] sm:$0xf]
    %v1055 = vld [vmem:[%s2 + $0x50] sm:$0xff]
    %1056 = vrot.lane.b32.xlu0 %v1048, 5
    %v1057 = vpop.permute.xlu0 %1056
    %1058 = vrot.lane.b32.xlu0 %v1050, 5
    %v1059 = vpop.permute.xlu0 %1058
    %v1060 = vsel %vm911, %v1057, %v1059
    %v1061 = vsel %vm911, %v1059, %v1057
    %v1062 = vsel %vm930, %v1061, 0.0
    %v1063 = vsel %vm931, %v1060, 0.0
    %v1064 = vsel %vm106, %v1048, 0.0
    %v1065 = vsel %vm107, %v1050, 0.0
    %1066 = vrot.lane.b32.xlu0 %v1048, 123
    %v1067 = vpop.permute.xlu0 %1066
    %1068 = vrot.lane.b32.xlu0 %v1050, 123
    %v1069 = vpop.permute.xlu0 %1068
    %v1070 = vsel %vm964, %v1067, %v1069
    %v1071 = vsel %vm964, %v1069, %v1067
    %v1072 = vsel %vm983, %v1070, 0.0
    %v1073 = vsel %vm984, %v1071, 0.0
    %v1074 = vpack.c.bf16 %v1064, %v1062
    %v1075 = vpack.c.bf16 %v1065, %v1063
    %v1076 = vpack.c.bf16 %v1072, %v1072
    %v1077 = vpack.c.bf16 %v1073, %v1073
    %1079 = vset.pattern.permute.xlu0 0
    %1080 = vperm.xlu0 %1079, %v1055
    %v1081 = vpop.permute.xlu0 %1080
    %v1084 = vsel %vm252, %v1054, 0
    %v1087 = vsel %vm256, %v1076, 0
    %v1090 = vsel %vm256, %v1077, 0
    %1092 = vmatprep.subr.bf16.mxu0 %v1075
    %1093 = vmatpush1.bf16.msra.mxu0 %v1074
    %1094 = vmatprep.subr.bf16.mxu0 %v1090
    %1095 = vmatpush1.bf16.msra.mxu0 %v1087
    %1096 = vmatprep.subr.bf16.mxu0 0
    %1097 = vmatpush1.bf16.msra.mxu0 0
    %1098 = vmatprep.subr.bf16.mxu0 0
    %1099 = vmatpush1.bf16.msra.mxu0 0
    %1100 = vmatprep.subr.bf16.mxu0 0
    %1101 = vmatpush1.bf16.msra.mxu0 0
    %1102 = vmatprep.subr.bf16.mxu0 0
    %1103 = vmatpush1.bf16.msra.mxu0 0
    %1104 = vmatprep.subr.bf16.mxu0 0
    %1105 = vmatpush1.bf16.msra.mxu0 0
    %1106 = vmatprep.subr.bf16.mxu0 0
    %1107 = vmatpush1.bf16.msra.mxu0 0
    %1108 = vmatprep.subr.bf16.mxu0 0
    %1109 = vmatpush1.bf16.msra.mxu0 0
    %1110 = vmatprep.subr.bf16.mxu0 0
    %1111 = vmatpush1.bf16.msra.mxu0 0
    %1112 = vmatprep.subr.bf16.mxu0 0
    %1113 = vmatpush1.bf16.msra.mxu0 0
    %1114 = vmatprep.subr.bf16.mxu0 0
    %1115 = vmatpush1.bf16.msra.mxu0 0
    %1116 = vmatprep.subr.bf16.mxu0 0
    %1117 = vmatpush1.bf16.msra.mxu0 0
    %1118 = vmatprep.subr.bf16.mxu0 0
    %1119 = vmatpush1.bf16.msra.mxu0 0
    %1120 = vmatprep.subr.bf16.mxu0 0
    %1121 = vmatpush1.bf16.msra.mxu0 0
    %1122 = vmatprep.subr.bf16.mxu0 0
    %1123 = vmatpush1.bf16.msra.mxu0 0
    %1124 = vmatprep.mubr.bf16.mxu0 0
    %1125 = vmatmul.mubr.bf16.gmra.mrb[0].mxu0 %v1084
    %v1126 = vpop.f32.mrb[0].mxu0
    %v1127 = vadd.f32 %v1081, %v1126
    %v1128 = vpop.f32.mrb[0].mxu0
    %v1129 = vadd.f32 %v1081, %v1128
    %v1130 = vpop.f32.mrb[0].mxu0
    %v1131 = vpop.f32.mrb[0].mxu0
    %1132 = vdwg.mxu0
    %v1133 = vmul.f32 %v1127, 0.5
    %v1134 = vmul.f32 %v1129, 0.5
    %v1135 = vmul.f32 %v1127, 0.70710677
    %v1136 = vmul.f32 %v1129, 0.70710677
    %v1137 = verf.f32.pop %v1135
    %v1138 = verf.f32.pop %v1136
    %v1139 = vadd.f32 %v1137, 1.0
    %v1140 = vadd.f32 %v1138, 1.0
    %v1141 = vmul.f32 %v1133, %v1139
    %v1142 = vmul.f32 %v1134, %v1140
    %v1143 = vld [vmem:[%s1 + $0x58] sm:$0xff]
    %v1144 = vld [vmem:[%s2 + $0x58] sm:$0xff]
    %1145 = vrot.lane.b32.xlu0 %v885, 18
    %v1146 = vpop.permute.xlu0 %1145
    %1147 = vrot.lane.b32.xlu0 %v887, 18
    %v1148 = vpop.permute.xlu0 %1147
    %1149 = vrot.lane.b32.xlu0 %v889, 18
    %v1150 = vpop.permute.xlu0 %1149
    %1151 = vrot.lane.b32.xlu0 %v891, 18
    %v1152 = vpop.permute.xlu0 %1151
    %1153 = vrot.lane.b32.xlu0 %v886, 18
    %v1154 = vpop.permute.xlu0 %1153
    %1155 = vrot.lane.b32.xlu0 %v888, 18
    %v1156 = vpop.permute.xlu0 %1155
    %1157 = vrot.lane.b32.xlu0 %v890, 18
    %v1158 = vpop.permute.xlu0 %1157
    %1159 = vrot.lane.b32.xlu0 %v892, 18
    %v1160 = vpop.permute.xlu0 %1159
    %vm1161 = vcmp.lt.s32.totalorder %v17, 18
    %v1162 = vsel %vm1161, %v1146, %v1154
    %v1163 = vsel %vm1161, %v1148, %v1156
    %v1164 = vsel %vm1161, %v1150, %v1158
    %v1165 = vsel %vm1161, %v1152, %v1160
    %v1166 = vsel %vm1161, %v1154, %v1146
    %v1167 = vsel %vm1161, %v1156, %v1148
    %v1168 = vsel %vm1161, %v1158, %v1150
    %v1169 = vsel %vm1161, %v1160, %v1152
    %v1170 = vadd.s32 %v41, 4294967278
    %v1171 = vadd.s32 %v42, 4294967278
    %vm1172 = vcmp.ge.s32.totalorder %v1170, 0
    %vm1173 = vcmp.ge.s32.totalorder %v1171, 0
    %vm1174 = vcmp.lt.s32.totalorder %v1170, 128
    %vm1175 = vcmp.lt.s32.totalorder %v1171, 128
    %vm1176 = vmand %vm1172, %vm1174
    %vm1177 = vmand %vm1173, %vm1175
    %v1178 = vsel %vm1176, 1, 0
    %v1179 = vsel %vm1177, 1, 0
    %vm1180 = vcmp.eq.s32.totalorder %v1178, 1
    %vm1181 = vcmp.eq.s32.totalorder %v1179, 1
    %v1182 = vsel %vm1180, %v1166, 0.0
    %v1183 = vsel %vm1181, %v1162, 0.0
    %v1184 = vsel %vm1180, %v1167, 0.0
    %v1185 = vsel %vm1181, %v1163, 0.0
    %v1186 = vsel %vm1180, %v1168, 0.0
    %v1187 = vsel %vm1181, %v1164, 0.0
    %v1188 = vsel %vm1180, %v1169, 0.0
    %v1189 = vsel %vm1181, %v1165, 0.0
    %1190 = vrot.lane.b32.xlu0 %v885, 9
    %v1191 = vpop.permute.xlu0 %1190
    %1192 = vrot.lane.b32.xlu0 %v887, 9
    %v1193 = vpop.permute.xlu0 %1192
    %1194 = vrot.lane.b32.xlu0 %v889, 9
    %v1195 = vpop.permute.xlu0 %1194
    %1196 = vrot.lane.b32.xlu0 %v891, 9
    %v1197 = vpop.permute.xlu0 %1196
    %1198 = vrot.lane.b32.xlu0 %v886, 9
    %v1199 = vpop.permute.xlu0 %1198
    %1200 = vrot.lane.b32.xlu0 %v888, 9
    %v1201 = vpop.permute.xlu0 %1200
    %1202 = vrot.lane.b32.xlu0 %v890, 9
    %v1203 = vpop.permute.xlu0 %1202
    %1204 = vrot.lane.b32.xlu0 %v892, 9
    %v1205 = vpop.permute.xlu0 %1204
    %vm1206 = vcmp.lt.s32.totalorder %v17, 9
    %v1207 = vsel %vm1206, %v1191, %v1199
    %v1208 = vsel %vm1206, %v1193, %v1201
    %v1209 = vsel %vm1206, %v1195, %v1203
    %v1210 = vsel %vm1206, %v1197, %v1205
    %v1211 = vsel %vm1206, %v1199, %v1191
    %v1212 = vsel %vm1206, %v1201, %v1193
    %v1213 = vsel %vm1206, %v1203, %v1195
    %v1214 = vsel %vm1206, %v1205, %v1197
    %v1215 = vadd.s32 %v41, 4294967287
    %v1216 = vadd.s32 %v42, 4294967287
    %vm1217 = vcmp.ge.s32.totalorder %v1215, 0
    %vm1218 = vcmp.ge.s32.totalorder %v1216, 0
    %vm1219 = vcmp.lt.s32.totalorder %v1215, 128
    %vm1220 = vcmp.lt.s32.totalorder %v1216, 128
    %vm1221 = vmand %vm1217, %vm1219
    %vm1222 = vmand %vm1218, %vm1220
    %v1223 = vsel %vm1221, 1, 0
    %v1224 = vsel %vm1222, 1, 0
    %vm1225 = vcmp.eq.s32.totalorder %v1223, 1
    %vm1226 = vcmp.eq.s32.totalorder %v1224, 1
    %v1227 = vsel %vm1225, %v1211, 0.0
    %v1228 = vsel %vm1226, %v1207, 0.0
    %v1229 = vsel %vm1225, %v1212, 0.0
    %v1230 = vsel %vm1226, %v1208, 0.0
    %v1231 = vsel %vm1225, %v1213, 0.0
    %v1232 = vsel %vm1226, %v1209, 0.0
    %v1233 = vsel %vm1225, %v1214, 0.0
    %v1234 = vsel %vm1226, %v1210, 0.0
    %1235 = vrot.lane.b32.xlu0 %v885, 119
    %v1236 = vpop.permute.xlu0 %1235
    %1237 = vrot.lane.b32.xlu0 %v887, 119
    %v1238 = vpop.permute.xlu0 %1237
    %1239 = vrot.lane.b32.xlu0 %v889, 119
    %v1240 = vpop.permute.xlu0 %1239
    %1241 = vrot.lane.b32.xlu0 %v891, 119
    %v1242 = vpop.permute.xlu0 %1241
    %1243 = vrot.lane.b32.xlu0 %v886, 119
    %v1244 = vpop.permute.xlu0 %1243
    %1245 = vrot.lane.b32.xlu0 %v888, 119
    %v1246 = vpop.permute.xlu0 %1245
    %1247 = vrot.lane.b32.xlu0 %v890, 119
    %v1248 = vpop.permute.xlu0 %1247
    %1249 = vrot.lane.b32.xlu0 %v892, 119
    %v1250 = vpop.permute.xlu0 %1249
    %vm1251 = vcmp.lt.s32.totalorder %v17, 119
    %v1252 = vsel %vm1251, %v1236, %v1244
    %v1253 = vsel %vm1251, %v1238, %v1246
    %v1254 = vsel %vm1251, %v1240, %v1248
    %v1255 = vsel %vm1251, %v1242, %v1250
    %v1256 = vsel %vm1251, %v1244, %v1236
    %v1257 = vsel %vm1251, %v1246, %v1238
    %v1258 = vsel %vm1251, %v1248, %v1240
    %v1259 = vsel %vm1251, %v1250, %v1242
    %v1260 = vadd.s32 %v41, 9
    %v1261 = vadd.s32 %v42, 9
    %vm1262 = vcmp.ge.s32.totalorder %v1260, 0
    %vm1263 = vcmp.ge.s32.totalorder %v1261, 0
    %vm1264 = vcmp.lt.s32.totalorder %v1260, 128
    %vm1265 = vcmp.lt.s32.totalorder %v1261, 128
    %vm1266 = vmand %vm1262, %vm1264
    %vm1267 = vmand %vm1263, %vm1265
    %v1268 = vsel %vm1266, 1, 0
    %v1269 = vsel %vm1267, 1, 0
    %vm1270 = vcmp.eq.s32.totalorder %v1268, 1
    %vm1271 = vcmp.eq.s32.totalorder %v1269, 1
    %v1272 = vsel %vm1270, %v1252, 0.0
    %v1273 = vsel %vm1271, %v1256, 0.0
    %v1274 = vsel %vm1270, %v1253, 0.0
    %v1275 = vsel %vm1271, %v1257, 0.0
    %v1276 = vsel %vm1270, %v1254, 0.0
    %v1277 = vsel %vm1271, %v1258, 0.0
    %v1278 = vsel %vm1270, %v1255, 0.0
    %v1279 = vsel %vm1271, %v1259, 0.0
    %1280 = vrot.lane.b32.xlu0 %v885, 110
    %v1281 = vpop.permute.xlu0 %1280
    %1282 = vrot.lane.b32.xlu0 %v887, 110
    %v1283 = vpop.permute.xlu0 %1282
    %1284 = vrot.lane.b32.xlu0 %v889, 110
    %v1285 = vpop.permute.xlu0 %1284
    %1286 = vrot.lane.b32.xlu0 %v891, 110
    %v1287 = vpop.permute.xlu0 %1286
    %1288 = vrot.lane.b32.xlu0 %v886, 110
    %v1289 = vpop.permute.xlu0 %1288
    %1290 = vrot.lane.b32.xlu0 %v888, 110
    %v1291 = vpop.permute.xlu0 %1290
    %1292 = vrot.lane.b32.xlu0 %v890, 110
    %v1293 = vpop.permute.xlu0 %1292
    %1294 = vrot.lane.b32.xlu0 %v892, 110
    %v1295 = vpop.permute.xlu0 %1294
    %vm1296 = vcmp.lt.s32.totalorder %v17, 110
    %v1297 = vsel %vm1296, %v1281, %v1289
    %v1298 = vsel %vm1296, %v1283, %v1291
    %v1299 = vsel %vm1296, %v1285, %v1293
    %v1300 = vsel %vm1296, %v1287, %v1295
    %v1301 = vsel %vm1296, %v1289, %v1281
    %v1302 = vsel %vm1296, %v1291, %v1283
    %v1303 = vsel %vm1296, %v1293, %v1285
    %v1304 = vsel %vm1296, %v1295, %v1287
    %v1305 = vadd.s32 %v41, 18
    %v1306 = vadd.s32 %v42, 18
    %vm1307 = vcmp.ge.s32.totalorder %v1305, 0
    %vm1308 = vcmp.ge.s32.totalorder %v1306, 0
    %vm1309 = vcmp.lt.s32.totalorder %v1305, 128
    %vm1310 = vcmp.lt.s32.totalorder %v1306, 128
    %vm1311 = vmand %vm1307, %vm1309
    %vm1312 = vmand %vm1308, %vm1310
    %v1313 = vsel %vm1311, 1, 0
    %v1314 = vsel %vm1312, 1, 0
    %vm1315 = vcmp.eq.s32.totalorder %v1313, 1
    %vm1316 = vcmp.eq.s32.totalorder %v1314, 1
    %v1317 = vsel %vm1315, %v1297, 0.0
    %v1318 = vsel %vm1316, %v1301, 0.0
    %v1319 = vsel %vm1315, %v1298, 0.0
    %v1320 = vsel %vm1316, %v1302, 0.0
    %v1321 = vsel %vm1315, %v1299, 0.0
    %v1322 = vsel %vm1316, %v1303, 0.0
    %v1323 = vsel %vm1315, %v1300, 0.0
    %v1324 = vsel %vm1316, %v1304, 0.0
    %v1325 = vpack.c.bf16 %v1184, %v1182
    %v1326 = vpack.c.bf16 %v1185, %v1183
    %v1327 = vpack.c.bf16 %v1188, %v1186
    %v1328 = vpack.c.bf16 %v1189, %v1187
    %v1329 = vpack.c.bf16 %v1229, %v1227
    %v1330 = vpack.c.bf16 %v1230, %v1228
    %v1331 = vpack.c.bf16 %v1233, %v1231
    %v1332 = vpack.c.bf16 %v1234, %v1232
    %v1333 = vpack.c.bf16 %v1274, %v1272
    %v1334 = vpack.c.bf16 %v1275, %v1273
    %v1335 = vpack.c.bf16 %v1278, %v1276
    %v1336 = vpack.c.bf16 %v1279, %v1277
    %v1337 = vpack.c.bf16 %v1319, %v1317
    %v1338 = vpack.c.bf16 %v1320, %v1318
    %v1339 = vpack.c.bf16 %v1323, %v1321
    %v1340 = vpack.c.bf16 %v1324, %v1322
    %1342 = vset.pattern.permute.xlu0 0
    %1343 = vperm.xlu0 %1342, %v1144
    %v1344 = vpop.permute.xlu0 %1343
    %v1347 = vunpack.c.l.b16 %v1143
    %v1348 = vunpack.c.h.b16 %v1143
    %v1349 = vpack.c.b16 %v1347, %v1347
    %v1350 = vpack.c.b16 %v1348, %v1348
    %v1353 = vsel %vm425, %v1350, 0
    %1355 = vmatprep.subr.bf16.mxu0 %v1326
    %1356 = vmatpush1.bf16.msra.mxu0 %v1325
    %1357 = vmatprep.subr.bf16.mxu0 %v1328
    %1358 = vmatpush1.bf16.msra.mxu0 %v1327
    %1359 = vmatprep.subr.bf16.mxu0 %v1330
    %1360 = vmatpush1.bf16.msra.mxu0 %v1329
    %1361 = vmatprep.subr.bf16.mxu0 %v1332
    %1362 = vmatpush1.bf16.msra.mxu0 %v1331
    %1363 = vmatprep.subr.bf16.mxu0 %v998
    %1364 = vmatpush1.bf16.msra.mxu0 %v997
    %1365 = vmatprep.subr.bf16.mxu0 %v1000
    %1366 = vmatpush1.bf16.msra.mxu0 %v999
    %1367 = vmatprep.subr.bf16.mxu0 %v1334
    %1368 = vmatpush1.bf16.msra.mxu0 %v1333
    %1369 = vmatprep.subr.bf16.mxu0 %v1336
    %1370 = vmatpush1.bf16.msra.mxu0 %v1335
    %1371 = vmatprep.subr.bf16.mxu0 %v1338
    %1372 = vmatpush1.bf16.msra.mxu0 %v1337
    %1373 = vmatprep.subr.bf16.mxu0 %v1340
    %1374 = vmatpush1.bf16.msra.mxu0 %v1339
    %1375 = vmatprep.subr.bf16.mxu0 0
    %1376 = vmatpush1.bf16.msra.mxu0 0
    %1377 = vmatprep.subr.bf16.mxu0 0
    %1378 = vmatpush1.bf16.msra.mxu0 0
    %1379 = vmatprep.subr.bf16.mxu0 0
    %1380 = vmatpush1.bf16.msra.mxu0 0
    %1381 = vmatprep.subr.bf16.mxu0 0
    %1382 = vmatpush1.bf16.msra.mxu0 0
    %1383 = vmatprep.subr.bf16.mxu0 0
    %1384 = vmatpush1.bf16.msra.mxu0 0
    %1385 = vmatprep.subr.bf16.mxu0 0
    %1386 = vmatpush1.bf16.msra.mxu0 0
    %1387 = vmatprep.mubr.bf16.mxu0 %v1353
    %1388 = vmatmul.mubr.bf16.gmra.mrb[0].mxu0 %v1349
    %v1389 = vpop.f32.mrb[0].mxu0
    %v1390 = vadd.f32 %v1344, %v1389
    %v1391 = vpop.f32.mrb[0].mxu0
    %v1392 = vadd.f32 %v1344, %v1391
    %v1393 = vpop.f32.mrb[0].mxu0
    %v1394 = vpop.f32.mrb[0].mxu0
    %1395 = vdwg.mxu0
    %v1396 = vld [vmem:[%s1 + $0x60] sm:$0xf]
    %v1397 = vld [vmem:[%s2 + $0x60] sm:$0xff]
    %1398 = vrot.lane.b32.xlu0 %v1390, 18
    %v1399 = vpop.permute.xlu0 %1398
    %1400 = vrot.lane.b32.xlu0 %v1392, 18
    %v1401 = vpop.permute.xlu0 %1400
    %v1402 = vsel %vm1161, %v1399, %v1401
    %v1403 = vsel %vm1161, %v1401, %v1399
    %v1404 = vsel %vm1180, %v1403, 0.0
    %v1405 = vsel %vm1181, %v1402, 0.0
    %1406 = vrot.lane.b32.xlu0 %v1390, 9
    %v1407 = vpop.permute.xlu0 %1406
    %1408 = vrot.lane.b32.xlu0 %v1392, 9
    %v1409 = vpop.permute.xlu0 %1408
    %v1410 = vsel %vm1206, %v1407, %v1409
    %v1411 = vsel %vm1206, %v1409, %v1407
    %v1412 = vsel %vm1225, %v1411, 0.0
    %v1413 = vsel %vm1226, %v1410, 0.0
    %v1414 = vsel %vm106, %v1390, 0.0
    %v1415 = vsel %vm107, %v1392, 0.0
    %1416 = vrot.lane.b32.xlu0 %v1390, 119
    %v1417 = vpop.permute.xlu0 %1416
    %1418 = vrot.lane.b32.xlu0 %v1392, 119
    %v1419 = vpop.permute.xlu0 %1418
    %v1420 = vsel %vm1251, %v1417, %v1419
    %v1421 = vsel %vm1251, %v1419, %v1417
    %v1422 = vsel %vm1270, %v1420, 0.0
    %v1423 = vsel %vm1271, %v1421, 0.0
    %1424 = vrot.lane.b32.xlu0 %v1390, 110
    %v1425 = vpop.permute.xlu0 %1424
    %1426 = vrot.lane.b32.xlu0 %v1392, 110
    %v1427 = vpop.permute.xlu0 %1426
    %v1428 = vsel %vm1296, %v1425, %v1427
    %v1429 = vsel %vm1296, %v1427, %v1425
    %v1430 = vsel %vm1315, %v1428, 0.0
    %v1431 = vsel %vm1316, %v1429, 0.0
    %v1432 = vpack.c.bf16 %v1412, %v1404
    %v1433 = vpack.c.bf16 %v1413, %v1405
    %v1434 = vpack.c.bf16 %v1422, %v1414
    %v1435 = vpack.c.bf16 %v1423, %v1415
    %v1436 = vpack.c.bf16 %v1430, %v1430
    %v1437 = vpack.c.bf16 %v1431, %v1431
    %1439 = vset.pattern.permute.xlu0 0
    %1440 = vperm.xlu0 %1439, %v1397
    %v1441 = vpop.permute.xlu0 %1440
    %v1444 = vsel %vm517, %v1396, 0
    %v1447 = vsel %vm256, %v1436, 0
    %v1450 = vsel %vm256, %v1437, 0
    %1452 = vmatprep.subr.bf16.mxu0 %v1433
    %1453 = vmatpush1.bf16.msra.mxu0 %v1432
    %1454 = vmatprep.subr.bf16.mxu0 %v1435
    %1455 = vmatpush1.bf16.msra.mxu0 %v1434
    %1456 = vmatprep.subr.bf16.mxu0 %v1450
    %1457 = vmatpush1.bf16.msra.mxu0 %v1447
    %1458 = vmatprep.subr.bf16.mxu0 0
    %1459 = vmatpush1.bf16.msra.mxu0 0
    %1460 = vmatprep.subr.bf16.mxu0 0
    %1461 = vmatpush1.bf16.msra.mxu0 0
    %1462 = vmatprep.subr.bf16.mxu0 0
    %1463 = vmatpush1.bf16.msra.mxu0 0
    %1464 = vmatprep.subr.bf16.mxu0 0
    %1465 = vmatpush1.bf16.msra.mxu0 0
    %1466 = vmatprep.subr.bf16.mxu0 0
    %1467 = vmatpush1.bf16.msra.mxu0 0
    %1468 = vmatprep.subr.bf16.mxu0 0
    %1469 = vmatpush1.bf16.msra.mxu0 0
    %1470 = vmatprep.subr.bf16.mxu0 0
    %1471 = vmatpush1.bf16.msra.mxu0 0
    %1472 = vmatprep.subr.bf16.mxu0 0
    %1473 = vmatpush1.bf16.msra.mxu0 0
    %1474 = vmatprep.subr.bf16.mxu0 0
    %1475 = vmatpush1.bf16.msra.mxu0 0
    %1476 = vmatprep.subr.bf16.mxu0 0
    %1477 = vmatpush1.bf16.msra.mxu0 0
    %1478 = vmatprep.subr.bf16.mxu0 0
    %1479 = vmatpush1.bf16.msra.mxu0 0
    %1480 = vmatprep.subr.bf16.mxu0 0
    %1481 = vmatpush1.bf16.msra.mxu0 0
    %1482 = vmatprep.subr.bf16.mxu0 0
    %1483 = vmatpush1.bf16.msra.mxu0 0
    %1484 = vmatprep.mubr.bf16.mxu0 0
    %1485 = vmatmul.mubr.bf16.gmra.mrb[0].mxu0 %v1444
    %v1486 = vpop.f32.mrb[0].mxu0
    %v1487 = vadd.f32 %v1441, %v1486
    %v1488 = vpop.f32.mrb[0].mxu0
    %v1489 = vadd.f32 %v1441, %v1488
    %v1490 = vpop.f32.mrb[0].mxu0
    %v1491 = vpop.f32.mrb[0].mxu0
    %1492 = vdwg.mxu0
    %v1493 = vmul.f32 %v1487, 0.5
    %v1494 = vmul.f32 %v1489, 0.5
    %v1495 = vmul.f32 %v1487, 0.70710677
    %v1496 = vmul.f32 %v1489, 0.70710677
    %v1497 = verf.f32.pop %v1495
    %v1498 = verf.f32.pop %v1496
    %v1499 = vadd.f32 %v1497, 1.0
    %v1500 = vadd.f32 %v1498, 1.0
    %v1501 = vmul.f32 %v1493, %v1499
    %v1502 = vmul.f32 %v1494, %v1500
    %v1503 = vld [vmem:[%s1 + $0x70] sm:$0xf]
    %v1504 = vld [vmem:[%s1 + $0x78] sm:$0xf]
    %v1505 = vld [vmem:[%s2 + $0x70] sm:$0xff]
    %v1506 = vld [vmem:[%s2 + $0x78] sm:$0xff]
    %v1507 = vpack.c.bf16 %v576, %v312
    %v1508 = vpack.c.bf16 %v577, %v313
    %1510 = vset.pattern.permute.xlu0 0
    %1511 = vperm.xlu0 %1510, %v1505
    %v1512 = vpop.permute.xlu0 %1511
    %1515 = vset.pattern.permute.xlu0 0
    %1516 = vperm.xlu0 %1515, %v1506
    %v1517 = vpop.permute.xlu0 %1516
    %v1521 = vunpack.c.l.b16 %v1503
    %v1522 = vunpack.c.l.b16 %v1504
    %v1523 = vpack.c.b16 %v1522, %v1521
    %vm1524 = vcmask 130048
    %v1526 = vsel %vm1524, %v1523, 0
    %1528 = vmatprep.subr.bf16.mxu0 %v1508
    %1529 = vmatpush1.bf16.msra.mxu0 %v1507
    %1530 = vmatprep.subr.bf16.mxu0 0
    %1531 = vmatpush1.bf16.msra.mxu0 0
    %1532 = vmatprep.subr.bf16.mxu0 0
    %1533 = vmatpush1.bf16.msra.mxu0 0
    %1534 = vmatprep.subr.bf16.mxu0 0
    %1535 = vmatpush1.bf16.msra.mxu0 0
    %1536 = vmatprep.subr.bf16.mxu0 0
    %1537 = vmatpush1.bf16.msra.mxu0 0
    %1538 = vmatprep.subr.bf16.mxu0 0
    %1539 = vmatpush1.bf16.msra.mxu0 0
    %1540 = vmatprep.subr.bf16.mxu0 0
    %1541 = vmatpush1.bf16.msra.mxu0 0
    %1542 = vmatprep.subr.bf16.mxu0 0
    %1543 = vmatpush1.bf16.msra.mxu0 0
    %1544 = vmatprep.subr.bf16.mxu0 0
    %1545 = vmatpush1.bf16.msra.mxu0 0
    %1546 = vmatprep.subr.bf16.mxu0 0
    %1547 = vmatpush1.bf16.msra.mxu0 0
    %1548 = vmatprep.subr.bf16.mxu0 0
    %1549 = vmatpush1.bf16.msra.mxu0 0
    %1550 = vmatprep.subr.bf16.mxu0 0
    %1551 = vmatpush1.bf16.msra.mxu0 0
    %1552 = vmatprep.subr.bf16.mxu0 0
    %1553 = vmatpush1.bf16.msra.mxu0 0
    %1554 = vmatprep.subr.bf16.mxu0 0
    %1555 = vmatpush1.bf16.msra.mxu0 0
    %1556 = vmatprep.subr.bf16.mxu0 0
    %1557 = vmatpush1.bf16.msra.mxu0 0
    %1558 = vmatprep.subr.bf16.mxu0 0
    %1559 = vmatpush1.bf16.msra.mxu0 0
    %1560 = vmatprep.mubr.bf16.mxu0 0
    %1561 = vmatmul.mubr.bf16.gmra.mrb[0].mxu0 %v1526
    %v1562 = vpop.f32.mrb[0].mxu0
    %v1563 = vadd.f32 %v1512, %v1562
    %v1564 = vpop.f32.mrb[0].mxu0
    %v1565 = vadd.f32 %v1512, %v1564
    %v1566 = vpop.f32.mrb[0].mxu0
    %v1567 = vadd.f32 %v1517, %v1566
    %v1568 = vpop.f32.mrb[0].mxu0
    %v1569 = vadd.f32 %v1517, %v1568
    %1570 = vdwg.mxu0
    %v1571 = vadd.f32 %v1141, %v1563
    %v1572 = vadd.f32 %v1142, %v1565
    %v1573 = vadd.f32 %v1501, %v1567
    %v1574 = vadd.f32 %v1502, %v1569
    %1575 = vrot.lane.b32.xlu0 %v885, 1
    %v1576 = vpop.permute.xlu0 %1575
    %1577 = vrot.lane.b32.xlu0 %v887, 1
    %v1578 = vpop.permute.xlu0 %1577
    %1579 = vrot.lane.b32.xlu0 %v889, 1
    %v1580 = vpop.permute.xlu0 %1579
    %1581 = vrot.lane.b32.xlu0 %v891, 1
    %v1582 = vpop.permute.xlu0 %1581
    %1583 = vrot.lane.b32.xlu0 %v886, 1
    %v1584 = vpop.permute.xlu0 %1583
    %1585 = vrot.lane.b32.xlu0 %v888, 1
    %v1586 = vpop.permute.xlu0 %1585
    %1587 = vrot.lane.b32.xlu0 %v890, 1
    %v1588 = vpop.permute.xlu0 %1587
    %1589 = vrot.lane.b32.xlu0 %v892, 1
    %v1590 = vpop.permute.xlu0 %1589
    %v1591 = vsel %vm69, %v1576, %v1584
    %v1592 = vsel %vm69, %v1578, %v1586
    %v1593 = vsel %vm69, %v1580, %v1588
    %v1594 = vsel %vm69, %v1582, %v1590
    %v1595 = vsel %vm69, %v1584, %v1576
    %v1596 = vsel %vm69, %v1586, %v1578
    %v1597 = vsel %vm69, %v1588, %v1580
    %v1598 = vsel %vm69, %v1590, %v1582
    %v1599 = vsel %vm582, %v1595, %v885
    %v1600 = vsel %vm583, %v1591, %v886
    %v1601 = vsel %vm582, %v1596, %v887
    %v1602 = vsel %vm583, %v1592, %v888
    %v1603 = vsel %vm582, %v1597, %v889
    %v1604 = vsel %vm583, %v1593, %v890
    %v1605 = vsel %vm582, %v1598, %v891
    %v1606 = vsel %vm583, %v1594, %v892
    %1607 = vrot.lane.b32.xlu0 %v885, 127
    %v1608 = vpop.permute.xlu0 %1607
    %1609 = vrot.lane.b32.xlu0 %v887, 127
    %v1610 = vpop.permute.xlu0 %1609
    %1611 = vrot.lane.b32.xlu0 %v889, 127
    %v1612 = vpop.permute.xlu0 %1611
    %1613 = vrot.lane.b32.xlu0 %v891, 127
    %v1614 = vpop.permute.xlu0 %1613
    %1615 = vrot.lane.b32.xlu0 %v886, 127
    %v1616 = vpop.permute.xlu0 %1615
    %1617 = vrot.lane.b32.xlu0 %v888, 127
    %v1618 = vpop.permute.xlu0 %1617
    %1619 = vrot.lane.b32.xlu0 %v890, 127
    %v1620 = vpop.permute.xlu0 %1619
    %1621 = vrot.lane.b32.xlu0 %v892, 127
    %v1622 = vpop.permute.xlu0 %1621
    %v1623 = vsel %vm132, %v1608, %v1616
    %v1624 = vsel %vm132, %v1610, %v1618
    %v1625 = vsel %vm132, %v1612, %v1620
    %v1626 = vsel %vm132, %v1614, %v1622
    %v1627 = vsel %vm132, %v1616, %v1608
    %v1628 = vsel %vm132, %v1618, %v1610
    %v1629 = vsel %vm132, %v1620, %v1612
    %v1630 = vsel %vm132, %v1622, %v1614
    %v1631 = vsel %vm596, %v1623, %v885
    %v1632 = vsel %vm597, %v1627, %v886
    %v1633 = vsel %vm596, %v1624, %v887
    %v1634 = vsel %vm597, %v1628, %v888
    %v1635 = vsel %vm596, %v1625, %v889
    %v1636 = vsel %vm597, %v1629, %v890
    %v1637 = vsel %vm596, %v1626, %v891
    %v1638 = vsel %vm597, %v1630, %v892
    %v1639 = vmax.f32 %v885, %v1599
    %v1640 = vmax.f32 %v886, %v1600
    %v1641 = vmax.f32 %v887, %v1601
    %v1642 = vmax.f32 %v888, %v1602
    %v1643 = vmax.f32 %v889, %v1603
    %v1644 = vmax.f32 %v890, %v1604
    %v1645 = vmax.f32 %v891, %v1605
    %v1646 = vmax.f32 %v892, %v1606
    %v1647 = vmax.f32 %v1639, %v1631
    %v1648 = vmax.f32 %v1640, %v1632
    %v1649 = vmax.f32 %v1641, %v1633
    %v1650 = vmax.f32 %v1642, %v1634
    %v1651 = vmax.f32 %v1643, %v1635
    %v1652 = vmax.f32 %v1644, %v1636
    %v1653 = vmax.f32 %v1645, %v1637
    %v1654 = vmax.f32 %v1646, %v1638
    %v1655 = vmul.f32 %v1647, 0.5
    %v1656 = vmul.f32 %v1648, 0.5
    %v1657 = vmul.f32 %v1649, 0.5
    %v1658 = vmul.f32 %v1650, 0.5
    %v1659 = vmul.f32 %v1651, 0.5
    %v1660 = vmul.f32 %v1652, 0.5
    %v1661 = vmul.f32 %v1653, 0.5
    %v1662 = vmul.f32 %v1654, 0.5
    %v1663 = vmul.f32 %v1647, 0.70710677
    %v1664 = vmul.f32 %v1648, 0.70710677
    %v1665 = vmul.f32 %v1649, 0.70710677
    %v1666 = vmul.f32 %v1650, 0.70710677
    %v1667 = vmul.f32 %v1651, 0.70710677
    %v1668 = vmul.f32 %v1652, 0.70710677
    %v1669 = vmul.f32 %v1653, 0.70710677
    %v1670 = vmul.f32 %v1654, 0.70710677
    %v1671 = verf.f32.pop %v1663
    %v1672 = verf.f32.pop %v1664
    %v1673 = verf.f32.pop %v1665
    %v1674 = verf.f32.pop %v1666
    %v1675 = verf.f32.pop %v1667
    %v1676 = verf.f32.pop %v1668
    %v1677 = verf.f32.pop %v1669
    %v1678 = verf.f32.pop %v1670
    %v1679 = vadd.f32 %v1671, 1.0
    %v1680 = vadd.f32 %v1672, 1.0
    %v1681 = vadd.f32 %v1673, 1.0
    %v1682 = vadd.f32 %v1674, 1.0
    %v1683 = vadd.f32 %v1675, 1.0
    %v1684 = vadd.f32 %v1676, 1.0
    %v1685 = vadd.f32 %v1677, 1.0
    %v1686 = vadd.f32 %v1678, 1.0
    %v1687 = vmul.f32 %v1655, %v1679
    %v1688 = vmul.f32 %v1656, %v1680
    %v1689 = vmul.f32 %v1657, %v1681
    %v1690 = vmul.f32 %v1658, %v1682
    %v1691 = vmul.f32 %v1659, %v1683
    %v1692 = vmul.f32 %v1660, %v1684
    %v1693 = vmul.f32 %v1661, %v1685
    %v1694 = vmul.f32 %v1662, %v1686
    %v1695 = vld [vmem:[%s1 + $0x68] sm:$0xf]
    %v1696 = vld [vmem:[%s2 + $0x68] sm:$0xff]
    %v1697 = vpack.c.bf16 %v1689, %v1687
    %v1698 = vpack.c.bf16 %v1690, %v1688
    %v1699 = vpack.c.bf16 %v1693, %v1691
    %v1700 = vpack.c.bf16 %v1694, %v1692
    %1702 = vset.pattern.permute.xlu0 0
    %1703 = vperm.xlu0 %1702, %v1696
    %v1704 = vpop.permute.xlu0 %1703
    %v1707 = vsel %vm425, %v1695, 0
    %1709 = vmatprep.subr.bf16.mxu0 %v1698
    %1710 = vmatpush1.bf16.msra.mxu0 %v1697
    %1711 = vmatprep.subr.bf16.mxu0 %v1700
    %1712 = vmatpush1.bf16.msra.mxu0 %v1699
    %1713 = vmatprep.subr.bf16.mxu0 0
    %1714 = vmatpush1.bf16.msra.mxu0 0
    %1715 = vmatprep.subr.bf16.mxu0 0
    %1716 = vmatpush1.bf16.msra.mxu0 0
    %1717 = vmatprep.subr.bf16.mxu0 0
    %1718 = vmatpush1.bf16.msra.mxu0 0
    %1719 = vmatprep.subr.bf16.mxu0 0
    %1720 = vmatpush1.bf16.msra.mxu0 0
    %1721 = vmatprep.subr.bf16.mxu0 0
    %1722 = vmatpush1.bf16.msra.mxu0 0
    %1723 = vmatprep.subr.bf16.mxu0 0
    %1724 = vmatpush1.bf16.msra.mxu0 0
    %1725 = vmatprep.subr.bf16.mxu0 0
    %1726 = vmatpush1.bf16.msra.mxu0 0
    %1727 = vmatprep.subr.bf16.mxu0 0
    %1728 = vmatpush1.bf16.msra.mxu0 0
    %1729 = vmatprep.subr.bf16.mxu0 0
    %1730 = vmatpush1.bf16.msra.mxu0 0
    %1731 = vmatprep.subr.bf16.mxu0 0
    %1732 = vmatpush1.bf16.msra.mxu0 0
    %1733 = vmatprep.subr.bf16.mxu0 0
    %1734 = vmatpush1.bf16.msra.mxu0 0
    %1735 = vmatprep.subr.bf16.mxu0 0
    %1736 = vmatpush1.bf16.msra.mxu0 0
    %1737 = vmatprep.subr.bf16.mxu0 0
    %1738 = vmatpush1.bf16.msra.mxu0 0
    %1739 = vmatprep.subr.bf16.mxu0 0
    %1740 = vmatpush1.bf16.msra.mxu0 0
    %1741 = vmatprep.mubr.bf16.mxu0 0
    %1742 = vmatmul.mubr.bf16.gmra.mrb[0].mxu0 %v1707
    %v1743 = vpop.f32.mrb[0].mxu0
    %v1744 = vadd.f32 %v1704, %v1743
    %v1745 = vpop.f32.mrb[0].mxu0
    %v1746 = vadd.f32 %v1704, %v1745
    %v1747 = vpop.f32.mrb[0].mxu0
    %v1748 = vpop.f32.mrb[0].mxu0
    %1749 = vdwg.mxu0
    %v1750 = vld [vmem:[%s1 + $0x80] sm:$0xf]
    %v1751 = vld [vmem:[%s1 + $0x88] sm:$0xf]
    %v1752 = vld [vmem:[%s1 + $0x90] sm:$0xf]
    %v1753 = vld [vmem:[%s1 + $0x98] sm:$0xf]
    %v1754 = vld [vmem:[%s1 + $0xa0] sm:$0xf]
    %v1755 = vld [vmem:[%s1 + $0xa8] sm:$0xf]
    %v1756 = vld [vmem:[%s1 + $0xb0] sm:$0xf]
    %v1757 = vld [vmem:[%s1 + $0xb8] sm:$0xf]
    %v1758 = vld [vmem:[%s2 + $0x80] sm:$0xff]
    %v1759 = vld [vmem:[%s2 + $0x88] sm:$0xff]
    %v1760 = vld [vmem:[%s2 + $0x90] sm:$0xff]
    %v1761 = vld [vmem:[%s2 + $0x98] sm:$0xff]
    %v1762 = vld [vmem:[%s2 + $0xa0] sm:$0xff]
    %v1763 = vld [vmem:[%s2 + $0xa8] sm:$0xff]
    %v1764 = vld [vmem:[%s2 + $0xb0] sm:$0xff]
    %v1765 = vld [vmem:[%s2 + $0xb8] sm:$0xff]
    %1766 = vrot.lane.b32.xlu0 %v1571, 1
    %v1767 = vpop.permute.xlu0 %1766
    %1768 = vrot.lane.b32.xlu0 %v1573, 1
    %v1769 = vpop.permute.xlu0 %1768
    %1770 = vrot.lane.b32.xlu0 %v1744, 1
    %v1771 = vpop.permute.xlu0 %1770
    %1772 = vrot.lane.b32.xlu0 %v1572, 1
    %v1773 = vpop.permute.xlu0 %1772
    %1774 = vrot.lane.b32.xlu0 %v1574, 1
    %v1775 = vpop.permute.xlu0 %1774
    %1776 = vrot.lane.b32.xlu0 %v1746, 1
    %v1777 = vpop.permute.xlu0 %1776
    %v1778 = vsel %vm69, %v1767, %v1773
    %v1779 = vsel %vm69, %v1769, %v1775
    %v1780 = vsel %vm69, %v1771, %v1777
    %v1781 = vsel %vm69, %v1773, %v1767
    %v1782 = vsel %vm69, %v1775, %v1769
    %v1783 = vsel %vm69, %v1777, %v1771
    %v1784 = vsel %vm88, %v1781, 0.0
    %v1785 = vsel %vm89, %v1778, 0.0
    %v1786 = vsel %vm88, %v1782, 0.0
    %v1787 = vsel %vm89, %v1779, 0.0
    %v1788 = vsel %vm88, %v1783, 0.0
    %v1789 = vsel %vm89, %v1780, 0.0
    %v1790 = vsel %vm106, %v1571, 0.0
    %v1791 = vsel %vm107, %v1572, 0.0
    %v1792 = vsel %vm106, %v1573, 0.0
    %v1793 = vsel %vm107, %v1574, 0.0
    %v1794 = vsel %vm106, %v1744, 0.0
    %v1795 = vsel %vm107, %v1746, 0.0
    %1796 = vrot.lane.b32.xlu0 %v1571, 127
    %v1797 = vpop.permute.xlu0 %1796
    %1798 = vrot.lane.b32.xlu0 %v1573, 127
    %v1799 = vpop.permute.xlu0 %1798
    %1800 = vrot.lane.b32.xlu0 %v1744, 127
    %v1801 = vpop.permute.xlu0 %1800
    %1802 = vrot.lane.b32.xlu0 %v1572, 127
    %v1803 = vpop.permute.xlu0 %1802
    %1804 = vrot.lane.b32.xlu0 %v1574, 127
    %v1805 = vpop.permute.xlu0 %1804
    %1806 = vrot.lane.b32.xlu0 %v1746, 127
    %v1807 = vpop.permute.xlu0 %1806
    %v1808 = vsel %vm132, %v1797, %v1803
    %v1809 = vsel %vm132, %v1799, %v1805
    %v1810 = vsel %vm132, %v1801, %v1807
    %v1811 = vsel %vm132, %v1803, %v1797
    %v1812 = vsel %vm132, %v1805, %v1799
    %v1813 = vsel %vm132, %v1807, %v1801
    %v1814 = vsel %vm151, %v1808, 0.0
    %v1815 = vsel %vm152, %v1811, 0.0
    %v1816 = vsel %vm151, %v1809, 0.0
    %v1817 = vsel %vm152, %v1812, 0.0
    %v1818 = vsel %vm151, %v1810, 0.0
    %v1819 = vsel %vm152, %v1813, 0.0
    %v1820 = vpack.c.bf16 %v1786, %v1784
    %v1821 = vpack.c.bf16 %v1787, %v1785
    %v1822 = vpack.c.bf16 %v1790, %v1788
    %v1823 = vpack.c.bf16 %v1791, %v1789
    %v1824 = vpack.c.bf16 %v1794, %v1792
    %v1825 = vpack.c.bf16 %v1795, %v1793
    %v1826 = vpack.c.bf16 %v1816, %v1814
    %v1827 = vpack.c.bf16 %v1817, %v1815
    %v1828 = vpack.c.bf16 %v1818, %v1818
    %v1829 = vpack.c.bf16 %v1819, %v1819
    %1831 = vset.pattern.permute.xlu0 0
    %1832 = vperm.xlu0 %1831, %v1758
    %v1833 = vpop.permute.xlu0 %1832
    %1836 = vset.pattern.permute.xlu0 0
    %1837 = vperm.xlu0 %1836, %v1759
    %v1838 = vpop.permute.xlu0 %1837
    %1841 = vset.pattern.permute.xlu0 0
    %1842 = vperm.xlu0 %1841, %v1760
    %v1843 = vpop.permute.xlu0 %1842
    %1846 = vset.pattern.permute.xlu0 0
    %1847 = vperm.xlu0 %1846, %v1761
    %v1848 = vpop.permute.xlu0 %1847
    %1851 = vset.pattern.permute.xlu0 0
    %1852 = vperm.xlu0 %1851, %v1762
    %v1853 = vpop.permute.xlu0 %1852
    %1856 = vset.pattern.permute.xlu0 0
    %1857 = vperm.xlu0 %1856, %v1763
    %v1858 = vpop.permute.xlu0 %1857
    %1861 = vset.pattern.permute.xlu0 0
    %1862 = vperm.xlu0 %1861, %v1764
    %v1863 = vpop.permute.xlu0 %1862
    %1866 = vset.pattern.permute.xlu0 0
    %1867 = vperm.xlu0 %1866, %v1765
    %v1868 = vpop.permute.xlu0 %1867
    %v1878 = vunpack.c.l.b16 %v1750
    %v1879 = vunpack.c.l.b16 %v1751
    %v1880 = vunpack.c.l.b16 %v1752
    %v1881 = vunpack.c.l.b16 %v1753
    %v1882 = vunpack.c.l.b16 %v1754
    %v1883 = vunpack.c.l.b16 %v1755
    %v1884 = vunpack.c.l.b16 %v1756
    %v1885 = vunpack.c.l.b16 %v1757
    %v1886 = vpack.c.b16 %v1879, %v1878
    %v1887 = vpack.c.b16 %v1881, %v1880
    %v1888 = vpack.c.b16 %v1883, %v1882
    %v1889 = vpack.c.b16 %v1885, %v1884
    %v1891 = vsel %vm819, %v1886, 0
    %v1894 = vsel %vm819, %v1887, 0
    %v1897 = vsel %vm819, %v1888, 0
    %v1900 = vsel %vm819, %v1889, 0
    %v1903 = vsel %vm256, %v1828, 0
    %v1906 = vsel %vm256, %v1829, 0
    %1908 = vmatprep.subr.bf16.mxu0 %v1821
    %1909 = vmatpush1.bf16.msra.mxu0 %v1820
    %1910 = vmatprep.subr.bf16.mxu0 %v1823
    %1911 = vmatpush1.bf16.msra.mxu0 %v1822
    %1912 = vmatprep.subr.bf16.mxu0 %v1825
    %1913 = vmatpush1.bf16.msra.mxu0 %v1824
    %1914 = vmatprep.subr.bf16.mxu0 %v1827
    %1915 = vmatpush1.bf16.msra.mxu0 %v1826
    %1916 = vmatprep.subr.bf16.mxu0 %v1906
    %1917 = vmatpush1.bf16.msra.mxu0 %v1903
    %1918 = vmatprep.subr.bf16.mxu0 0
    %1919 = vmatpush1.bf16.msra.mxu0 0
    %1920 = vmatprep.subr.bf16.mxu0 0
    %1921 = vmatpush1.bf16.msra.mxu0 0
    %1922 = vmatprep.subr.bf16.mxu0 0
    %1923 = vmatpush1.bf16.msra.mxu0 0
    %1924 = vmatprep.subr.bf16.mxu0 0
    %1925 = vmatpush1.bf16.msra.mxu0 0
    %1926 = vmatprep.subr.bf16.mxu0 0
    %1927 = vmatpush1.bf16.msra.mxu0 0
    %1928 = vmatprep.subr.bf16.mxu0 0
    %1929 = vmatpush1.bf16.msra.mxu0 0
    %1930 = vmatprep.subr.bf16.mxu0 0
    %1931 = vmatpush1.bf16.msra.mxu0 0
    %1932 = vmatprep.subr.bf16.mxu0 0
    %1933 = vmatpush1.bf16.msra.mxu0 0
    %1934 = vmatprep.subr.bf16.mxu0 0
    %1935 = vmatpush1.bf16.msra.mxu0 0
    %1936 = vmatprep.subr.bf16.mxu0 0
    %1937 = vmatpush1.bf16.msra.mxu0 0
    %1938 = vmatprep.subr.bf16.mxu0 0
    %1939 = vmatpush1.bf16.msra.mxu0 0
    %1940 = vmatprep.mubr.bf16.mxu0 0
    %1941 = vmatmul.mubr.bf16.gmra.mrb[0].mxu0 %v1891
    %v1942 = vpop.f32.mrb[0].mxu0
    %v1943 = vadd.f32 %v1833, %v1942
    %v1944 = vpop.f32.mrb[0].mxu0
    %v1945 = vadd.f32 %v1833, %v1944
    %v1946 = vpop.f32.mrb[0].mxu0
    %v1947 = vadd.f32 %v1838, %v1946
    %v1948 = vpop.f32.mrb[0].mxu0
    %v1949 = vadd.f32 %v1838, %v1948
    %1950 = vmatprep.mubr.bf16.mxu0 0
    %1951 = vmatmul.mubr.bf16.gmra.mrb[0].mxu0 %v1894
    %v1952 = vpop.f32.mrb[0].mxu0
    %v1953 = vadd.f32 %v1843, %v1952
    %v1954 = vpop.f32.mrb[0].mxu0
    %v1955 = vadd.f32 %v1843, %v1954
    %v1956 = vpop.f32.mrb[0].mxu0
    %v1957 = vadd.f32 %v1848, %v1956
    %v1958 = vpop.f32.mrb[0].mxu0
    %v1959 = vadd.f32 %v1848, %v1958
    %1960 = vmatprep.mubr.bf16.mxu0 0
    %1961 = vmatmul.mubr.bf16.gmra.mrb[0].mxu0 %v1897
    %v1962 = vpop.f32.mrb[0].mxu0
    %v1963 = vadd.f32 %v1853, %v1962
    %v1964 = vpop.f32.mrb[0].mxu0
    %v1965 = vadd.f32 %v1853, %v1964
    %v1966 = vpop.f32.mrb[0].mxu0
    %v1967 = vadd.f32 %v1858, %v1966
    %v1968 = vpop.f32.mrb[0].mxu0
    %v1969 = vadd.f32 %v1858, %v1968
    %1970 = vmatprep.mubr.bf16.mxu0 0
    %1971 = vmatmul.mubr.bf16.gmra.mrb[0].mxu0 %v1900
    %v1972 = vpop.f32.mrb[0].mxu0
    %v1973 = vadd.f32 %v1863, %v1972
    %v1974 = vpop.f32.mrb[0].mxu0
    %v1975 = vadd.f32 %v1863, %v1974
    %v1976 = vpop.f32.mrb[0].mxu0
    %v1977 = vadd.f32 %v1868, %v1976
    %v1978 = vpop.f32.mrb[0].mxu0
    %v1979 = vadd.f32 %v1868, %v1978
    %1980 = vdwg.mxu0
    %v1981 = vld [vmem:[%s1 + $0xc0] sm:$0xf]
    %v1982 = vld [vmem:[%s1 + $0xc8] sm:$0xf]
    %v1983 = vld [vmem:[%s1 + $0xd0] sm:$0xf]
    %v1984 = vld [vmem:[%s1 + $0xd8] sm:$0xf]
    %v1985 = vld [vmem:[%s1 + $0xe0] sm:$0xf]
    %v1986 = vld [vmem:[%s1 + $0xe8] sm:$0xf]
    %v1987 = vld [vmem:[%s1 + $0xf0] sm:$0xf]
    %v1988 = vld [vmem:[%s1 + $0xf8] sm:$0xf]
    %v1989 = vld [vmem:[%s2 + $0xc0] sm:$0xff]
    %v1990 = vld [vmem:[%s2 + $0xc8] sm:$0xff]
    %v1991 = vld [vmem:[%s2 + $0xd0] sm:$0xff]
    %v1992 = vld [vmem:[%s2 + $0xd8] sm:$0xff]
    %v1993 = vld [vmem:[%s2 + $0xe0] sm:$0xff]
    %v1994 = vld [vmem:[%s2 + $0xe8] sm:$0xff]
    %v1995 = vld [vmem:[%s2 + $0xf0] sm:$0xff]
    %v1996 = vld [vmem:[%s2 + $0xf8] sm:$0xff]
    %v1997 = vpack.c.bf16 %v887, %v885
    %v1998 = vpack.c.bf16 %v888, %v886
    %v1999 = vpack.c.bf16 %v891, %v889
    %v2000 = vpack.c.bf16 %v892, %v890
    %2002 = vset.pattern.permute.xlu0 0
    %2003 = vperm.xlu0 %2002, %v1989
    %v2004 = vpop.permute.xlu0 %2003
    %2007 = vset.pattern.permute.xlu0 0
    %2008 = vperm.xlu0 %2007, %v1990
    %v2009 = vpop.permute.xlu0 %2008
    %2012 = vset.pattern.permute.xlu0 0
    %2013 = vperm.xlu0 %2012, %v1991
    %v2014 = vpop.permute.xlu0 %2013
    %2017 = vset.pattern.permute.xlu0 0
    %2018 = vperm.xlu0 %2017, %v1992
    %v2019 = vpop.permute.xlu0 %2018
    %2022 = vset.pattern.permute.xlu0 0
    %2023 = vperm.xlu0 %2022, %v1993
    %v2024 = vpop.permute.xlu0 %2023
    %2027 = vset.pattern.permute.xlu0 0
    %2028 = vperm.xlu0 %2027, %v1994
    %v2029 = vpop.permute.xlu0 %2028
    %2032 = vset.pattern.permute.xlu0 0
    %2033 = vperm.xlu0 %2032, %v1995
    %v2034 = vpop.permute.xlu0 %2033
    %2037 = vset.pattern.permute.xlu0 0
    %2038 = vperm.xlu0 %2037, %v1996
    %v2039 = vpop.permute.xlu0 %2038
    %v2049 = vunpack.c.l.b16 %v1981
    %v2050 = vunpack.c.l.b16 %v1982
    %v2051 = vunpack.c.l.b16 %v1983
    %v2052 = vunpack.c.l.b16 %v1984
    %v2053 = vunpack.c.l.b16 %v1985
    %v2054 = vunpack.c.l.b16 %v1986
    %v2055 = vunpack.c.l.b16 %v1987
    %v2056 = vunpack.c.l.b16 %v1988
    %v2057 = vpack.c.b16 %v2050, %v2049
    %v2058 = vpack.c.b16 %v2052, %v2051
    %v2059 = vpack.c.b16 %v2054, %v2053
    %v2060 = vpack.c.b16 %v2056, %v2055
    %v2062 = vsel %vm425, %v2057, 0
    %v2065 = vsel %vm425, %v2058, 0
    %v2068 = vsel %vm425, %v2059, 0
    %v2071 = vsel %vm425, %v2060, 0
    %2073 = vmatprep.subr.bf16.mxu0 %v1998
    %2074 = vmatpush1.bf16.msra.mxu0 %v1997
    %2075 = vmatprep.subr.bf16.mxu0 %v2000
    %2076 = vmatpush1.bf16.msra.mxu0 %v1999
    %2077 = vmatprep.subr.bf16.mxu0 0
    %2078 = vmatpush1.bf16.msra.mxu0 0
    %2079 = vmatprep.subr.bf16.mxu0 0
    %2080 = vmatpush1.bf16.msra.mxu0 0
    %2081 = vmatprep.subr.bf16.mxu0 0
    %2082 = vmatpush1.bf16.msra.mxu0 0
    %2083 = vmatprep.subr.bf16.mxu0 0
    %2084 = vmatpush1.bf16.msra.mxu0 0
    %2085 = vmatprep.subr.bf16.mxu0 0
    %2086 = vmatpush1.bf16.msra.mxu0 0
    %2087 = vmatprep.subr.bf16.mxu0 0
    %2088 = vmatpush1.bf16.msra.mxu0 0
    %2089 = vmatprep.subr.bf16.mxu0 0
    %2090 = vmatpush1.bf16.msra.mxu0 0
    %2091 = vmatprep.subr.bf16.mxu0 0
    %2092 = vmatpush1.bf16.msra.mxu0 0
    %2093 = vmatprep.subr.bf16.mxu0 0
    %2094 = vmatpush1.bf16.msra.mxu0 0
    %2095 = vmatprep.subr.bf16.mxu0 0
    %2096 = vmatpush1.bf16.msra.mxu0 0
    %2097 = vmatprep.subr.bf16.mxu0 0
    %2098 = vmatpush1.bf16.msra.mxu0 0
    %2099 = vmatprep.subr.bf16.mxu0 0
    %2100 = vmatpush1.bf16.msra.mxu0 0
    %2101 = vmatprep.subr.bf16.mxu0 0
    %2102 = vmatpush1.bf16.msra.mxu0 0
    %2103 = vmatprep.subr.bf16.mxu0 0
    %2104 = vmatpush1.bf16.msra.mxu0 0
    %2105 = vmatprep.mubr.bf16.mxu0 0
    %2106 = vmatmul.mubr.bf16.gmra.mrb[0].mxu0 %v2062
    %v2107 = vpop.f32.mrb[0].mxu0
    %v2108 = vadd.f32 %v2004, %v2107
    %v2109 = vpop.f32.mrb[0].mxu0
    %v2110 = vadd.f32 %v2004, %v2109
    %v2111 = vpop.f32.mrb[0].mxu0
    %v2112 = vadd.f32 %v2009, %v2111
    %v2113 = vpop.f32.mrb[0].mxu0
    %v2114 = vadd.f32 %v2009, %v2113
    %2115 = vmatprep.mubr.bf16.mxu0 0
    %2116 = vmatmul.mubr.bf16.gmra.mrb[0].mxu0 %v2065
    %v2117 = vpop.f32.mrb[0].mxu0
    %v2118 = vadd.f32 %v2014, %v2117
    %v2119 = vpop.f32.mrb[0].mxu0
    %v2120 = vadd.f32 %v2014, %v2119
    %v2121 = vpop.f32.mrb[0].mxu0
    %v2122 = vadd.f32 %v2019, %v2121
    %v2123 = vpop.f32.mrb[0].mxu0
    %v2124 = vadd.f32 %v2019, %v2123
    %2125 = vmatprep.mubr.bf16.mxu0 0
    %2126 = vmatmul.mubr.bf16.gmra.mrb[0].mxu0 %v2068
    %v2127 = vpop.f32.mrb[0].mxu0
    %v2128 = vadd.f32 %v2024, %v2127
    %v2129 = vpop.f32.mrb[0].mxu0
    %v2130 = vadd.f32 %v2024, %v2129
    %v2131 = vpop.f32.mrb[0].mxu0
    %v2132 = vadd.f32 %v2029, %v2131
    %v2133 = vpop.f32.mrb[0].mxu0
    %v2134 = vadd.f32 %v2029, %v2133
    %2135 = vmatprep.mubr.bf16.mxu0 0
    %2136 = vmatmul.mubr.bf16.gmra.mrb[0].mxu0 %v2071
    %v2137 = vpop.f32.mrb[0].mxu0
    %v2138 = vadd.f32 %v2034, %v2137
    %v2139 = vpop.f32.mrb[0].mxu0
    %v2140 = vadd.f32 %v2034, %v2139
    %v2141 = vpop.f32.mrb[0].mxu0
    %v2142 = vadd.f32 %v2039, %v2141
    %v2143 = vpop.f32.mrb[0].mxu0
    %v2144 = vadd.f32 %v2039, %v2143
    %2145 = vdwg.mxu0
    %v2146 = vadd.f32 %v1943, %v2108
    %v2147 = vadd.f32 %v1945, %v2110
    %v2148 = vadd.f32 %v1947, %v2112
    %v2149 = vadd.f32 %v1949, %v2114
    %v2150 = vadd.f32 %v1953, %v2118
    %v2151 = vadd.f32 %v1955, %v2120
    %v2152 = vadd.f32 %v1957, %v2122
    %v2153 = vadd.f32 %v1959, %v2124
    %v2154 = vadd.f32 %v1963, %v2128
    %v2155 = vadd.f32 %v1965, %v2130
    %v2156 = vadd.f32 %v1967, %v2132
    %v2157 = vadd.f32 %v1969, %v2134
    %v2158 = vadd.f32 %v1973, %v2138
    %v2159 = vadd.f32 %v1975, %v2140
    %v2160 = vadd.f32 %v1977, %v2142
    %v2161 = vadd.f32 %v1979, %v2144
    %2162 = vst [vmem:[#allocation2] sm:$0xff] %v2146
    %2163 = vst [vmem:[#allocation2 + $0x8] sm:$0xff] %v2147
    %2164 = vst [vmem:[#allocation2 + $0x10] sm:$0xff] %v2148
    %2165 = vst [vmem:[#allocation2 + $0x18] sm:$0xff] %v2149
    %2166 = vst [vmem:[#allocation2 + $0x20] sm:$0xff] %v2150
    %2167 = vst [vmem:[#allocation2 + $0x28] sm:$0xff] %v2151
    %2168 = vst [vmem:[#allocation2 + $0x30] sm:$0xff] %v2152
    %2169 = vst [vmem:[#allocation2 + $0x38] sm:$0xff] %v2153
    %2170 = vst [vmem:[#allocation2 + $0x40] sm:$0xff] %v2154
    %2171 = vst [vmem:[#allocation2 + $0x48] sm:$0xff] %v2155
    %2172 = vst [vmem:[#allocation2 + $0x50] sm:$0xff] %v2156
    %2173 = vst [vmem:[#allocation2 + $0x58] sm:$0xff] %v2157
    %2174 = vst [vmem:[#allocation2 + $0x60] sm:$0xff] %v2158
    %2175 = vst [vmem:[#allocation2 + $0x68] sm:$0xff] %v2159
    %2176 = vst [vmem:[#allocation2 + $0x70] sm:$0xff] %v2160
    %2177 = vst [vmem:[#allocation2 + $0x78] sm:$0xff] %v2161
    // Predicated region
    $region14: #{tpu_custom_call.1} parent=1 // pred_check
      _
    $region15: #{tpu_custom_call.1} parent=1 // pred_check_branch
      %2179 = sbr.rel (0) target = $region17
    $region16: #{tpu_custom_call.1} parent=1 // pred_region
      %s2181 = ssub.s32 2048, 2048
      %2182 = vsyncadd [#allocation3], %s2181
      %s2183 = sshll.u32 [#allocation2], 4
      %s2184 = int_to_ptr.vmem [resolvable:$true] %s2183
      %2189 = dma.vmem_to_hbm [thread:$0]  %s2184, 2048, %s3, [#allocation3], 256, 256, 16
    $region17: #{tpu_custom_call.1} parent=1 // pred_fallthru
      _
    // Predicated region
    $region18: #{tpu_custom_call.1} parent=1 // pred_check
      _
    $region19: #{tpu_custom_call.1} parent=1 // pred_check_branch
      %2191 = sbr.rel (0) target = $region21
    $region20: #{tpu_custom_call.1} parent=1 // pred_region
      %2192 = dma.done [#allocation3], 2048
    $region21: #{tpu_custom_call.1} parent=1 // pred_fallthru
      _
    %2193 = vsyncpa [#allocation3], 1

</llo_original>
